<compile_context>
chip_gen: v7x
topology: tpu7x:2x2x1
jax: 0.10.0
libtpu: 0.0.40
codegen_flags: <defaults>
</compile_context>

<pallas_src>
import jax
import jax.numpy as jnp
from jax import lax
from jax.experimental import pallas as pl
from jax.experimental.pallas import tpu as pltpu  # noqa: F401  (kept for parity with TPU-kernel conventions)

# ----------------------------- config (stands in for `args`) -----------------
N = 64          # number of graph nodes
LATDIM = 32     # args.latdim
HEADS = 4       # args.head
DH = LATDIM // HEADS
GCN_LAYERS = 2  # args.gcn_layer


def _full_spec(shape):
    # full-array block resident in VMEM (shapes are tiny; no grid)
    return pl.BlockSpec(shape, lambda: tuple(0 for _ in shape))


# ----------------------------- fused Pallas kernel ----------------------------
def fused_forward_kernel(adj_ref, x_ref, wqkv_ref, sel_ref, o_ref):
    """Entire Model.forward in a single kernel invocation."""
    adj = adj_ref[...]                       # (N, N)
    wqkv = wqkv_ref[...]                     # (D, 3D)
    head_sel = sel_ref[...]                  # (H*N, D) constant 0/1 block-diagonal selector

    # Edge mask replicated per head along lanes: (N, H*N). Computed ONCE, reused by all GT layers.
    adj_all = jnp.concatenate([adj] * HEADS, axis=1)
    mask_all = adj_all != 0.0

    def gt(x):
        # fused QKV projection: one (N, D) @ (D, 3D) MXU matmul
        qkv = jnp.dot(x, wqkv, preferred_element_type=jnp.float32)
        q = qkv[:, :LATDIM]                          # (N, D)
        k = qkv[:, LATDIM:2 * LATDIM]                # (N, D)
        v = qkv[:, 2 * LATDIM:]                      # (N, D)

        # Stack heads along the sublane axis and zero out cross-head features with the
        # constant block-diagonal selector: row block h of k_bd/v_bd only keeps head h's columns.
        k_bd = jnp.concatenate([k] * HEADS, axis=0) * head_sel    # (H*N, D)
        v_bd = jnp.concatenate([v] * HEADS, axis=0) * head_sel    # (H*N, D)
        # Append the selector itself so the PV matmul also produces the per-head row sums
        # (softmax denominators), already broadcast across each head's DH output columns.
        v_cat = jnp.concatenate([v_bd, head_sel], axis=1)         # (H*N, 2D)

        # All-head scores in one lane-dense tensor: contract trailing dims (NT matmul, no transposes).
        s = lax.dot_general(q, k_bd, (((1,), (1,)), ((), ())),
                            preferred_element_type=jnp.float32)   # (N, H*N)
        s = jnp.clip(s, -10.0, 10.0)
        e = jnp.where(mask_all, jnp.exp(s), 0.0)                  # (N, H*N), full lane occupancy

        r = jnp.dot(e, v_cat, preferred_element_type=jnp.float32)  # (N, 2D)
        pv = r[:, :LATDIM]                   # sum_j att * v   (unnormalized)
        denom = r[:, LATDIM:]                # per-head row sums, repeated DH times per head
        # exact reciprocal kept (approx=True flagged as a tolerance risk in review)
        return pv * pl.reciprocal(denom + 1e-8)

    cur = x_ref[...]          # embedsLst[0]
    acc = cur                 # running sum(embedsLst)
    # NOTE: the first GT call in the PyTorch code discards its result and never enters the
    # final sum, so it is omitted (semantics-preserving dead-code removal).
    for _ in range(GCN_LAYERS):  # static unroll, GCN_LAYERS is small & fixed
        g = jnp.dot(adj, cur, preferred_element_type=jnp.float32)  # GCNLayer: spmm(adj, x)
        t = gt(g)                                                  # GT layer on the GCN output
        acc = acc + g + t
        cur = t                                                    # next layer reads embedsLst[-1]
    o_ref[...] = acc  # single full-tile store


# ----------------------------- wrapper -----------------------------------------
def _model_forward(adj, embeds, wqkv, head_sel):
    return pl.pallas_call(
        fused_forward_kernel,
        out_shape=jax.ShapeDtypeStruct((N, LATDIM), jnp.float32),
        in_specs=[_full_spec((N, N)),
                  _full_spec((N, LATDIM)),
                  _full_spec((LATDIM, 3 * LATDIM)),
                  _full_spec((HEADS * N, LATDIM))],
        out_specs=_full_spec((N, LATDIM)),
    )(adj, embeds, wqkv, head_sel)


model_forward = jax.jit(_model_forward)


def make_head_selector():
    """Constant (H*N, D) 0/1 matrix: row block h selects only head h's DH feature columns."""
    row_head = (jnp.arange(HEADS * N) // N)[:, None]     # (H*N, 1)
    col_head = (jnp.arange(LATDIM) // DH)[None, :]       # (1, D)
    return (row_head == col_head).astype(jnp.float32)


# ----------------------------- pure-JAX reference ------------------------------
def gt_ref(adj, x, wq, wk, wv):
    q = (x @ wq).reshape(N, HEADS, DH)
    k = (x @ wk).reshape(N, HEADS, DH)
    v = (x @ wv).reshape(N, HEADS, DH)
    s = jnp.einsum('ihd,jhd->hij', q, k)
    s = jnp.clip(s, -10.0, 10.0)
    mask = (adj != 0.0)[None, :, :]
    e = jnp.where(mask, jnp.exp(s), 0.0)
    att = e / (jnp.sum(e, axis=2, keepdims=True) + 1e-8)
    out = jnp.einsum('hij,jhd->ihd', att, v).reshape(N, LATDIM)
    return out


def model_ref(adj, embeds, params):
    wq, wk, wv = params
    lst = [embeds]
    _ = gt_ref(adj, embeds, wq, wk, wv)   # discarded, as in the PyTorch module
    for _i in range(GCN_LAYERS):
        g = adj @ lst[-1]
        lst.append(g)
        lst.append(gt_ref(adj, g, wq, wk, wv))
    return sum(lst)


# ----------------------------- main ---------------------------------------------
if __name__ == "__main__":
    key = jax.random.PRNGKey(0)
    k_adj, k_emb, k_q, k_k, k_v = jax.random.split(key, 5)

    # deterministic dense adjacency (edges where uniform < 0.3, self loops, unit weights)
    edge_prob = jax.random.uniform(k_adj, (N, N))
    adj = (edge_prob < 0.3).astype(jnp.float32)
    adj = jnp.maximum(adj, jnp.eye(N, dtype=jnp.float32))

    embeds = jax.random.normal(k_emb, (N, LATDIM), dtype=jnp.float32) * 0.1

    scale = 1.0 / (LATDIM ** 0.5)
    wq = jax.random.normal(k_q, (LATDIM, LATDIM), dtype=jnp.float32) * scale
    wk = jax.random.normal(k_k, (LATDIM, LATDIM), dtype=jnp.float32) * scale
    wv = jax.random.normal(k_v, (LATDIM, LATDIM), dtype=jnp.float32) * scale

    # host-side fusion of the three projection matrices into one (D, 3D) matrix
    wqkv = jnp.concatenate([wq, wk, wv], axis=1)
    head_sel = make_head_selector()

    out = model_forward(adj, embeds, wqkv, head_sel)
    out = jax.block_until_ready(out)

    ref = model_ref(adj, embeds, (wq, wk, wv))
    assert out.shape == (N, LATDIM)
    assert jnp.allclose(out, ref, atol=5e-4, rtol=5e-4), "mismatch vs reference"

    print("KERNEL_OK")
</pallas_src>

<mosaic_0001>
module attributes {stable_mosaic.version = 11 : i64} {
  func.func @fused_forward_kernel(%arg0: memref<64x64xf32, #tpu.memory_space<vmem>>, %arg1: memref<64x32xf32, #tpu.memory_space<vmem>>, %arg2: memref<32x96xf32, #tpu.memory_space<vmem>>, %arg3: memref<256x32xf32, #tpu.memory_space<vmem>>, %arg4: memref<64x32xf32, #tpu.memory_space<vmem>>) attributes {dimension_semantics = [], scalar_prefetch = 0 : i64, scratch_operands = 0 : i64, tpu.core_type = #tpu.core_type<tc>} {
    %c0 = arith.constant 0 : index
    %c0_0 = arith.constant 0 : index
    %0 = vector.load %arg0[%c0, %c0_0] : memref<64x64xf32, #tpu.memory_space<vmem>>, vector<64x64xf32>
    %c0_1 = arith.constant 0 : index
    %c0_2 = arith.constant 0 : index
    %1 = vector.load %arg2[%c0_1, %c0_2] : memref<32x96xf32, #tpu.memory_space<vmem>>, vector<32x96xf32>
    %c0_3 = arith.constant 0 : index
    %c0_4 = arith.constant 0 : index
    %2 = vector.load %arg3[%c0_3, %c0_4] : memref<256x32xf32, #tpu.memory_space<vmem>>, vector<256x32xf32>
    %3 = tpu.concatenate %0, %0, %0, %0 in 1 : vector<64x64xf32>, vector<64x64xf32>, vector<64x64xf32>, vector<64x64xf32> -> vector<64x256xf32>
    %cst = arith.constant 0.000000e+00 : f32
    %4 = vector.broadcast %cst : f32 to vector<64x256xf32>
    %5 = arith.cmpf one, %3, %4 : vector<64x256xf32>
    %c0_5 = arith.constant 0 : index
    %c0_6 = arith.constant 0 : index
    %6 = vector.load %arg1[%c0_5, %c0_6] : memref<64x32xf32, #tpu.memory_space<vmem>>, vector<64x32xf32>
    %cst_7 = arith.constant dense<0.000000e+00> : vector<64x32xf32>
    %7 = tpu.matmul %0, %6, %cst_7 {dimension_numbers = #tpu.dot_dimension_numbers<[1], [0], [0], [1], [0, 0, 1, 1], [], []>} : vector<64x64xf32>, vector<64x32xf32>, vector<64x32xf32> -> vector<64x32xf32>
    %cst_8 = arith.constant dense<0.000000e+00> : vector<64x96xf32>
    %8 = tpu.matmul %7, %1, %cst_8 {dimension_numbers = #tpu.dot_dimension_numbers<[1], [0], [0], [1], [0, 0, 1, 1], [], []>} : vector<64x32xf32>, vector<32x96xf32>, vector<64x96xf32> -> vector<64x96xf32>
    %9 = vector.extract_strided_slice %8 {offsets = [0, 0], sizes = [64, 32], strides = [1, 1]} : vector<64x96xf32> to vector<64x32xf32>
    %10 = vector.extract_strided_slice %8 {offsets = [0, 32], sizes = [64, 32], strides = [1, 1]} : vector<64x96xf32> to vector<64x32xf32>
    %11 = vector.extract_strided_slice %8 {offsets = [0, 64], sizes = [64, 32], strides = [1, 1]} : vector<64x96xf32> to vector<64x32xf32>
    %12 = tpu.concatenate %10, %10, %10, %10 in 0 : vector<64x32xf32>, vector<64x32xf32>, vector<64x32xf32>, vector<64x32xf32> -> vector<256x32xf32>
    %13 = arith.mulf %12, %2 : vector<256x32xf32>
    %14 = tpu.concatenate %11, %11, %11, %11 in 0 : vector<64x32xf32>, vector<64x32xf32>, vector<64x32xf32>, vector<64x32xf32> -> vector<256x32xf32>
    %15 = arith.mulf %14, %2 : vector<256x32xf32>
    %16 = tpu.concatenate %15, %2 in 1 : vector<256x32xf32>, vector<256x32xf32> -> vector<256x64xf32>
    %cst_9 = arith.constant dense<0.000000e+00> : vector<64x256xf32>
    %17 = tpu.matmul %9, %13, %cst_9 {dimension_numbers = #tpu.dot_dimension_numbers<[1], [1], [0], [0], [0, 0, 1, 0], [], []>} : vector<64x32xf32>, vector<256x32xf32>, vector<64x256xf32> -> vector<64x256xf32>
    %cst_10 = arith.constant -1.000000e+01 : f32
    %cst_11 = arith.constant 1.000000e+01 : f32
    %18 = vector.broadcast %cst_10 : f32 to vector<64x256xf32>
    %19 = arith.maximumf %18, %17 : vector<64x256xf32>
    %20 = vector.broadcast %cst_11 : f32 to vector<64x256xf32>
    %21 = arith.minimumf %20, %19 : vector<64x256xf32>
    %22 = math.exp %21 : vector<64x256xf32>
    %cst_12 = arith.constant 0.000000e+00 : f32
    %23 = vector.broadcast %cst_12 : f32 to vector<64x256xf32>
    %24 = arith.select %5, %22, %23 : vector<64x256xi1>, vector<64x256xf32>
    %cst_13 = arith.constant dense<0.000000e+00> : vector<64x64xf32>
    %25 = tpu.matmul %24, %16, %cst_13 {dimension_numbers = #tpu.dot_dimension_numbers<[1], [0], [0], [1], [0, 0, 1, 1], [], []>} : vector<64x256xf32>, vector<256x64xf32>, vector<64x64xf32> -> vector<64x64xf32>
    %26 = vector.extract_strided_slice %25 {offsets = [0, 0], sizes = [64, 32], strides = [1, 1]} : vector<64x64xf32> to vector<64x32xf32>
    %27 = vector.extract_strided_slice %25 {offsets = [0, 32], sizes = [64, 32], strides = [1, 1]} : vector<64x64xf32> to vector<64x32xf32>
    %cst_14 = arith.constant 9.99999993E-9 : f32
    %28 = vector.broadcast %cst_14 : f32 to vector<64x32xf32>
    %29 = arith.addf %27, %28 : vector<64x32xf32>
    %30 = tpu.reciprocal %29 : vector<64x32xf32> -> vector<64x32xf32>
    %31 = arith.mulf %26, %30 : vector<64x32xf32>
    %32 = arith.addf %6, %7 : vector<64x32xf32>
    %33 = arith.addf %32, %31 : vector<64x32xf32>
    %cst_15 = arith.constant dense<0.000000e+00> : vector<64x32xf32>
    %34 = tpu.matmul %0, %31, %cst_15 {dimension_numbers = #tpu.dot_dimension_numbers<[1], [0], [0], [1], [0, 0, 1, 1], [], []>} : vector<64x64xf32>, vector<64x32xf32>, vector<64x32xf32> -> vector<64x32xf32>
    %cst_16 = arith.constant dense<0.000000e+00> : vector<64x96xf32>
    %35 = tpu.matmul %34, %1, %cst_16 {dimension_numbers = #tpu.dot_dimension_numbers<[1], [0], [0], [1], [0, 0, 1, 1], [], []>} : vector<64x32xf32>, vector<32x96xf32>, vector<64x96xf32> -> vector<64x96xf32>
    %36 = vector.extract_strided_slice %35 {offsets = [0, 0], sizes = [64, 32], strides = [1, 1]} : vector<64x96xf32> to vector<64x32xf32>
    %37 = vector.extract_strided_slice %35 {offsets = [0, 32], sizes = [64, 32], strides = [1, 1]} : vector<64x96xf32> to vector<64x32xf32>
    %38 = vector.extract_strided_slice %35 {offsets = [0, 64], sizes = [64, 32], strides = [1, 1]} : vector<64x96xf32> to vector<64x32xf32>
    %39 = tpu.concatenate %37, %37, %37, %37 in 0 : vector<64x32xf32>, vector<64x32xf32>, vector<64x32xf32>, vector<64x32xf32> -> vector<256x32xf32>
    %40 = arith.mulf %39, %2 : vector<256x32xf32>
    %41 = tpu.concatenate %38, %38, %38, %38 in 0 : vector<64x32xf32>, vector<64x32xf32>, vector<64x32xf32>, vector<64x32xf32> -> vector<256x32xf32>
    %42 = arith.mulf %41, %2 : vector<256x32xf32>
    %43 = tpu.concatenate %42, %2 in 1 : vector<256x32xf32>, vector<256x32xf32> -> vector<256x64xf32>
    %cst_17 = arith.constant dense<0.000000e+00> : vector<64x256xf32>
    %44 = tpu.matmul %36, %40, %cst_17 {dimension_numbers = #tpu.dot_dimension_numbers<[1], [1], [0], [0], [0, 0, 1, 0], [], []>} : vector<64x32xf32>, vector<256x32xf32>, vector<64x256xf32> -> vector<64x256xf32>
    %cst_18 = arith.constant -1.000000e+01 : f32
    %cst_19 = arith.constant 1.000000e+01 : f32
    %45 = vector.broadcast %cst_18 : f32 to vector<64x256xf32>
    %46 = arith.maximumf %45, %44 : vector<64x256xf32>
    %47 = vector.broadcast %cst_19 : f32 to vector<64x256xf32>
    %48 = arith.minimumf %47, %46 : vector<64x256xf32>
    %49 = math.exp %48 : vector<64x256xf32>
    %cst_20 = arith.constant 0.000000e+00 : f32
    %50 = vector.broadcast %cst_20 : f32 to vector<64x256xf32>
    %51 = arith.select %5, %49, %50 : vector<64x256xi1>, vector<64x256xf32>
    %cst_21 = arith.constant dense<0.000000e+00> : vector<64x64xf32>
    %52 = tpu.matmul %51, %43, %cst_21 {dimension_numbers = #tpu.dot_dimension_numbers<[1], [0], [0], [1], [0, 0, 1, 1], [], []>} : vector<64x256xf32>, vector<256x64xf32>, vector<64x64xf32> -> vector<64x64xf32>
    %53 = vector.extract_strided_slice %52 {offsets = [0, 0], sizes = [64, 32], strides = [1, 1]} : vector<64x64xf32> to vector<64x32xf32>
    %54 = vector.extract_strided_slice %52 {offsets = [0, 32], sizes = [64, 32], strides = [1, 1]} : vector<64x64xf32> to vector<64x32xf32>
    %cst_22 = arith.constant 9.99999993E-9 : f32
    %55 = vector.broadcast %cst_22 : f32 to vector<64x32xf32>
    %56 = arith.addf %54, %55 : vector<64x32xf32>
    %57 = tpu.reciprocal %56 : vector<64x32xf32> -> vector<64x32xf32>
    %58 = arith.mulf %53, %57 : vector<64x32xf32>
    %59 = arith.addf %33, %34 : vector<64x32xf32>
    %60 = arith.addf %59, %58 : vector<64x32xf32>
    %c0_23 = arith.constant 0 : index
    %c0_24 = arith.constant 0 : index
    %61 = vector.load %arg4[%c0_23, %c0_24] : memref<64x32xf32, #tpu.memory_space<vmem>>, vector<64x32xf32>
    tpu.vector_store %arg4[%c0_23, %c0_24], %60 {strides = array<i32>} : memref<64x32xf32, #tpu.memory_space<vmem>>, vector<64x32xf32>,
    return
  }
}

</mosaic_0001>

<llo_original>
// kernel: _model_forward.1
$region0: #{_model_forward.1}
  #allocation0 [shape = 'u32[]', space=smem, size = 0x4, offset = 0x4, fixed_abs, tag = 'smem constant byte address 0x4 - core index']
  #allocation1 [shape = 'u32[144,128]{1,0:T(1,128)}', space=vmem, size = 0x12000, scoped, tag = 'internal scratch']
  %s0 = inlined_call_operand.vmem [shape: f32[64,64], index: 0, kind: input, shape index: {}]
  %s1 = inlined_call_operand.vmem [shape: f32[64,32], index: 1, kind: input, shape index: {}]
  %s2 = inlined_call_operand.vmem [shape: f32[32,96], index: 2, kind: input, shape index: {}]
  %s3 = inlined_call_operand.vmem [shape: f32[256,32], index: 3, kind: input, shape index: {}]
  %s4 = inlined_call_operand.vmem [shape: f32[64,32], index: 4, kind: output, shape index: {}]
  %s5 = sld [smem:[#allocation0]]
  $region26: #{_model_forward.1} parent=0
    _
  %s7 = ssub.s32 1, %s5
  %s8 = scalar_select 0, %s7, %s5
  // Predicated region
  $region2: #{_model_forward.1} parent=0 // pred_check
    _
  $region3: #{_model_forward.1} parent=0 // pred_check_branch
    %10 = sbr.rel (0) target = $region5
  $region4: #{_model_forward.1} parent=0 // pred_region
    _
  $region5: #{_model_forward.1} parent=0 // pred_fallthru
    _
  // Predicated region
  $region6: #{_model_forward.1} parent=0 // pred_check
    _
  $region7: #{_model_forward.1} parent=0 // pred_check_branch
    %12 = sbr.rel (0) target = $region9
  $region8: #{_model_forward.1} parent=0 // pred_region
    _
  $region9: #{_model_forward.1} parent=0 // pred_fallthru
    _
  // Predicated region
  $region10: #{_model_forward.1} parent=0 // pred_check
    _
  $region11: #{_model_forward.1} parent=0 // pred_check_branch
    %14 = sbr.rel (0) target = $region13
  $region12: #{_model_forward.1} parent=0 // pred_region
    _
  $region13: #{_model_forward.1} parent=0 // pred_fallthru
    _
  // Predicated region
  $region14: #{_model_forward.1} parent=0 // pred_check
    _
  $region15: #{_model_forward.1} parent=0 // pred_check_branch
    %16 = sbr.rel (0) target = $region17
  $region16: #{_model_forward.1} parent=0 // pred_region
    _
  $region17: #{_model_forward.1} parent=0 // pred_fallthru
    _
  %v17 = vld [vmem:[%s0] sm:$0xff]
  %v18 = vld [vmem:[%s0 + $0x8] sm:$0xff]
  %v19 = vld [vmem:[%s0 + $0x10] sm:$0xff]
  %v20 = vld [vmem:[%s0 + $0x18] sm:$0xff]
  %v21 = vld [vmem:[%s0 + $0x20] sm:$0xff]
  %v22 = vld [vmem:[%s0 + $0x28] sm:$0xff]
  %v23 = vld [vmem:[%s0 + $0x30] sm:$0xff]
  %v24 = vld [vmem:[%s0 + $0x38] sm:$0xff]
  %v25 = vld [vmem:[%s2] sm:$0xff]
  %v26 = vld [vmem:[%s2 + $0x8] sm:$0xff]
  %v27 = vld [vmem:[%s2 + $0x10] sm:$0xff]
  %v28 = vld [vmem:[%s2 + $0x18] sm:$0xff]
  %v29 = vld [vmem:[%s3] sm:$0xff]
  %v30 = vld [vmem:[%s3 + $0x8] sm:$0xff]
  %v31 = vld [vmem:[%s3 + $0x10] sm:$0xff]
  %v32 = vld [vmem:[%s3 + $0x18] sm:$0xff]
  %v33 = vld [vmem:[%s3 + $0x20] sm:$0xff]
  %v34 = vld [vmem:[%s3 + $0x28] sm:$0xff]
  %v35 = vld [vmem:[%s3 + $0x30] sm:$0xff]
  %v36 = vld [vmem:[%s3 + $0x38] sm:$0xff]
  %v37 = vld [vmem:[%s3 + $0x40] sm:$0xff]
  %v38 = vld [vmem:[%s3 + $0x48] sm:$0xff]
  %v39 = vld [vmem:[%s3 + $0x50] sm:$0xff]
  %v40 = vld [vmem:[%s3 + $0x58] sm:$0xff]
  %v41 = vld [vmem:[%s3 + $0x60] sm:$0xff]
  %v42 = vld [vmem:[%s3 + $0x68] sm:$0xff]
  %v43 = vld [vmem:[%s3 + $0x70] sm:$0xff]
  %v44 = vld [vmem:[%s3 + $0x78] sm:$0xff]
  %v45 = vld [vmem:[%s3 + $0x80] sm:$0xff]
  %v46 = vld [vmem:[%s3 + $0x88] sm:$0xff]
  %v47 = vld [vmem:[%s3 + $0x90] sm:$0xff]
  %v48 = vld [vmem:[%s3 + $0x98] sm:$0xff]
  %v49 = vld [vmem:[%s3 + $0xa0] sm:$0xff]
  %v50 = vld [vmem:[%s3 + $0xa8] sm:$0xff]
  %v51 = vld [vmem:[%s3 + $0xb0] sm:$0xff]
  %v52 = vld [vmem:[%s3 + $0xb8] sm:$0xff]
  %v53 = vld [vmem:[%s3 + $0xc0] sm:$0xff]
  %v54 = vld [vmem:[%s3 + $0xc8] sm:$0xff]
  %v55 = vld [vmem:[%s3 + $0xd0] sm:$0xff]
  %v56 = vld [vmem:[%s3 + $0xd8] sm:$0xff]
  %v57 = vld [vmem:[%s3 + $0xe0] sm:$0xff]
  %v58 = vld [vmem:[%s3 + $0xe8] sm:$0xff]
  %v59 = vld [vmem:[%s3 + $0xf0] sm:$0xff]
  %v60 = vld [vmem:[%s3 + $0xf8] sm:$0xff]
  %69 = vrot.lane.b32.xlu0 %v17, 64
  %v70 = vpop.permute.xlu0 %69
  %71 = vrot.lane.b32.xlu0 %v18, 64
  %v72 = vpop.permute.xlu0 %71
  %73 = vrot.lane.b32.xlu0 %v19, 64
  %v74 = vpop.permute.xlu0 %73
  %75 = vrot.lane.b32.xlu0 %v20, 64
  %v76 = vpop.permute.xlu0 %75
  %77 = vrot.lane.b32.xlu0 %v21, 64
  %v78 = vpop.permute.xlu0 %77
  %79 = vrot.lane.b32.xlu0 %v22, 64
  %v80 = vpop.permute.xlu0 %79
  %81 = vrot.lane.b32.xlu0 %v23, 64
  %v82 = vpop.permute.xlu0 %81
  %83 = vrot.lane.b32.xlu0 %v24, 64
  %v84 = vpop.permute.xlu0 %83
  %vm93 = vcmask 523264
  %v94 = vsel %vm93, %v17, %v70
  %v95 = vsel %vm93, %v18, %v72
  %v96 = vsel %vm93, %v19, %v74
  %v97 = vsel %vm93, %v20, %v76
  %v98 = vsel %vm93, %v21, %v78
  %v99 = vsel %vm93, %v22, %v80
  %v100 = vsel %vm93, %v23, %v82
  %v101 = vsel %vm93, %v24, %v84
  %vm102 = vcmp.ne.f32.partialorder %v94, 0.0
  %vm103 = vcmp.ne.f32.partialorder %v95, 0.0
  %vm104 = vcmp.ne.f32.partialorder %v96, 0.0
  %vm105 = vcmp.ne.f32.partialorder %v97, 0.0
  %vm106 = vcmp.ne.f32.partialorder %v98, 0.0
  %vm107 = vcmp.ne.f32.partialorder %v99, 0.0
  %vm108 = vcmp.ne.f32.partialorder %v100, 0.0
  %vm109 = vcmp.ne.f32.partialorder %v101, 0.0
  %v110 = vld [vmem:[%s1] sm:$0xff]
  %v111 = vld [vmem:[%s1 + $0x8] sm:$0xff]
  %v112 = vld [vmem:[%s1 + $0x10] sm:$0xff]
  %v113 = vld [vmem:[%s1 + $0x18] sm:$0xff]
  %v114 = vld [vmem:[%s1 + $0x20] sm:$0xff]
  %v115 = vld [vmem:[%s1 + $0x28] sm:$0xff]
  %v116 = vld [vmem:[%s1 + $0x30] sm:$0xff]
  %v117 = vld [vmem:[%s1 + $0x38] sm:$0xff]
  %v118 = vsel %vm93, %v17, 0
  %v120 = vsel %vm93, %v18, 0
  %v122 = vsel %vm93, %v19, 0
  %v124 = vsel %vm93, %v20, 0
  %v126 = vsel %vm93, %v21, 0
  %v128 = vsel %vm93, %v22, 0
  %v130 = vsel %vm93, %v23, 0
  %v132 = vsel %vm93, %v24, 0
  %134 = vmatprep.subr.mxu0 0.0
  %135 = vmatpush1.msra.mxu0 %v110
  %136 = vmatprep.subr.mxu0 0.0
  %137 = vmatpush1.msra.mxu0 %v111
  %138 = vmatprep.subr.mxu0 0.0
  %139 = vmatpush1.msra.mxu0 %v112
  %140 = vmatprep.subr.mxu0 0.0
  %141 = vmatpush1.msra.mxu0 %v113
  %142 = vmatprep.subr.mxu0 0.0
  %143 = vmatpush1.msra.mxu0 %v114
  %144 = vmatprep.subr.mxu0 0.0
  %145 = vmatpush1.msra.mxu0 %v115
  %146 = vmatprep.subr.mxu0 0.0
  %147 = vmatpush1.msra.mxu0 %v116
  %148 = vmatprep.subr.mxu0 0.0
  %149 = vmatpush1.msra.mxu0 %v117
  %150 = vmatprep.subr.mxu0 0.0
  %151 = vmatpush1.msra.mxu0 0.0
  %152 = vmatprep.subr.mxu0 0.0
  %153 = vmatpush1.msra.mxu0 0.0
  %154 = vmatprep.subr.mxu0 0.0
  %155 = vmatpush1.msra.mxu0 0.0
  %156 = vmatprep.subr.mxu0 0.0
  %157 = vmatpush1.msra.mxu0 0.0
  %158 = vmatprep.subr.mxu0 0.0
  %159 = vmatpush1.msra.mxu0 0.0
  %160 = vmatprep.subr.mxu0 0.0
  %161 = vmatpush1.msra.mxu0 0.0
  %162 = vmatprep.subr.mxu0 0.0
  %163 = vmatpush1.msra.mxu0 0.0
  %164 = vmatprep.subr.mxu0 0.0
  %165 = vmatpush1.msra.mxu0 0.0
  %166 = vmatprep.subr.mxu0 0.0
  %167 = vmatpush1.msra.mxu0 0.0
  %168 = vmatprep.subr.mxu0 0.0
  %169 = vmatpush1.msra.mxu0 0.0
  %170 = vmatprep.subr.mxu0 0.0
  %171 = vmatpush1.msra.mxu0 0.0
  %172 = vmatprep.subr.mxu0 0.0
  %173 = vmatpush1.msra.mxu0 0.0
  %174 = vmatprep.subr.mxu0 0.0
  %175 = vmatpush1.msra.mxu0 0.0
  %176 = vmatprep.subr.mxu0 0.0
  %177 = vmatpush1.msra.mxu0 0.0
  %178 = vmatprep.subr.mxu0 0.0
  %179 = vmatpush1.msra.mxu0 0.0
  %180 = vmatprep.subr.mxu0 0.0
  %181 = vmatpush1.msra.mxu0 0.0
  %182 = vmatprep.subr.mxu0 0.0
  %183 = vmatpush1.msra.mxu0 0.0
  %184 = vmatprep.subr.mxu0 0.0
  %185 = vmatpush1.msra.mxu0 0.0
  %186 = vmatprep.subr.mxu0 0.0
  %187 = vmatpush1.msra.mxu0 0.0
  %188 = vmatprep.subr.mxu0 0.0
  %189 = vmatpush1.msra.mxu0 0.0
  %190 = vmatprep.subr.mxu0 0.0
  %191 = vmatpush1.msra.mxu0 0.0
  %192 = vmatprep.subr.mxu0 0.0
  %193 = vmatpush1.msra.mxu0 0.0
  %194 = vmatprep.subr.mxu0 0.0
  %195 = vmatpush1.msra.mxu0 0.0
  %196 = vmatprep.subr.mxu0 0.0
  %197 = vmatpush1.msra.mxu0 0.0
  %198 = vmatprep.mubr.f32.mxu0 0.0
  %199 = vmatmul.mubr.f32.gmra.mrb[0].mxu0 %v118
  %v200 = vpop.f32.mrb[0].mxu0
  %v201 = vadd.f32 0.0, %v200
  %v202 = vpop.f32.mrb[0].mxu0
  %203 = vmatprep.mubr.f32.mxu0 0.0
  %204 = vmatmul.mubr.f32.gmra.mrb[0].mxu0 %v120
  %v205 = vpop.f32.mrb[0].mxu0
  %v206 = vadd.f32 0.0, %v205
  %v207 = vpop.f32.mrb[0].mxu0
  %208 = vmatprep.mubr.f32.mxu0 0.0
  %209 = vmatmul.mubr.f32.gmra.mrb[0].mxu0 %v122
  %v210 = vpop.f32.mrb[0].mxu0
  %v211 = vadd.f32 0.0, %v210
  %v212 = vpop.f32.mrb[0].mxu0
  %213 = vmatprep.mubr.f32.mxu0 0.0
  %214 = vmatmul.mubr.f32.gmra.mrb[0].mxu0 %v124
  %v215 = vpop.f32.mrb[0].mxu0
  %v216 = vadd.f32 0.0, %v215
  %v217 = vpop.f32.mrb[0].mxu0
  %218 = vmatprep.mubr.f32.mxu0 0.0
  %219 = vmatmul.mubr.f32.gmra.mrb[0].mxu0 %v126
  %v220 = vpop.f32.mrb[0].mxu0
  %v221 = vadd.f32 0.0, %v220
  %v222 = vpop.f32.mrb[0].mxu0
  %223 = vmatprep.mubr.f32.mxu0 0.0
  %224 = vmatmul.mubr.f32.gmra.mrb[0].mxu0 %v128
  %v225 = vpop.f32.mrb[0].mxu0
  %v226 = vadd.f32 0.0, %v225
  %v227 = vpop.f32.mrb[0].mxu0
  %228 = vmatprep.mubr.f32.mxu0 0.0
  %229 = vmatmul.mubr.f32.gmra.mrb[0].mxu0 %v130
  %v230 = vpop.f32.mrb[0].mxu0
  %v231 = vadd.f32 0.0, %v230
  %v232 = vpop.f32.mrb[0].mxu0
  %233 = vmatprep.mubr.f32.mxu0 0.0
  %234 = vmatmul.mubr.f32.gmra.mrb[0].mxu0 %v132
  %v235 = vpop.f32.mrb[0].mxu0
  %v236 = vadd.f32 0.0, %v235
  %v237 = vpop.f32.mrb[0].mxu0
  %238 = vdwg.mxu0
  %vm239 = vcmask 261120
  %v241 = vsel %vm239, %v201, 0
  %v244 = vsel %vm239, %v206, 0
  %v247 = vsel %vm239, %v211, 0
  %v250 = vsel %vm239, %v216, 0
  %v253 = vsel %vm239, %v221, 0
  %v256 = vsel %vm239, %v226, 0
  %v259 = vsel %vm239, %v231, 0
  %v262 = vsel %vm239, %v236, 0
  %264 = vmatprep.subr.mxu0 0.0
  %265 = vmatpush1.msra.mxu0 %v25
  %266 = vmatprep.subr.mxu0 0.0
  %267 = vmatpush1.msra.mxu0 %v26
  %268 = vmatprep.subr.mxu0 0.0
  %269 = vmatpush1.msra.mxu0 %v27
  %270 = vmatprep.subr.mxu0 0.0
  %271 = vmatpush1.msra.mxu0 %v28
  %272 = vmatprep.subr.mxu0 0.0
  %273 = vmatpush1.msra.mxu0 0.0
  %274 = vmatprep.subr.mxu0 0.0
  %275 = vmatpush1.msra.mxu0 0.0
  %276 = vmatprep.subr.mxu0 0.0
  %277 = vmatpush1.msra.mxu0 0.0
  %278 = vmatprep.subr.mxu0 0.0
  %279 = vmatpush1.msra.mxu0 0.0
  %280 = vmatprep.subr.mxu0 0.0
  %281 = vmatpush1.msra.mxu0 0.0
  %282 = vmatprep.subr.mxu0 0.0
  %283 = vmatpush1.msra.mxu0 0.0
  %284 = vmatprep.subr.mxu0 0.0
  %285 = vmatpush1.msra.mxu0 0.0
  %286 = vmatprep.subr.mxu0 0.0
  %287 = vmatpush1.msra.mxu0 0.0
  %288 = vmatprep.subr.mxu0 0.0
  %289 = vmatpush1.msra.mxu0 0.0
  %290 = vmatprep.subr.mxu0 0.0
  %291 = vmatpush1.msra.mxu0 0.0
  %292 = vmatprep.subr.mxu0 0.0
  %293 = vmatpush1.msra.mxu0 0.0
  %294 = vmatprep.subr.mxu0 0.0
  %295 = vmatpush1.msra.mxu0 0.0
  %296 = vmatprep.subr.mxu0 0.0
  %297 = vmatpush1.msra.mxu0 0.0
  %298 = vmatprep.subr.mxu0 0.0
  %299 = vmatpush1.msra.mxu0 0.0
  %300 = vmatprep.subr.mxu0 0.0
  %301 = vmatpush1.msra.mxu0 0.0
  %302 = vmatprep.subr.mxu0 0.0
  %303 = vmatpush1.msra.mxu0 0.0
  %304 = vmatprep.subr.mxu0 0.0
  %305 = vmatpush1.msra.mxu0 0.0
  %306 = vmatprep.subr.mxu0 0.0
  %307 = vmatpush1.msra.mxu0 0.0
  %308 = vmatprep.subr.mxu0 0.0
  %309 = vmatpush1.msra.mxu0 0.0
  %310 = vmatprep.subr.mxu0 0.0
  %311 = vmatpush1.msra.mxu0 0.0
  %312 = vmatprep.subr.mxu0 0.0
  %313 = vmatpush1.msra.mxu0 0.0
  %314 = vmatprep.subr.mxu0 0.0
  %315 = vmatpush1.msra.mxu0 0.0
  %316 = vmatprep.subr.mxu0 0.0
  %317 = vmatpush1.msra.mxu0 0.0
  %318 = vmatprep.subr.mxu0 0.0
  %319 = vmatpush1.msra.mxu0 0.0
  %320 = vmatprep.subr.mxu0 0.0
  %321 = vmatpush1.msra.mxu0 0.0
  %322 = vmatprep.subr.mxu0 0.0
  %323 = vmatpush1.msra.mxu0 0.0
  %324 = vmatprep.subr.mxu0 0.0
  %325 = vmatpush1.msra.mxu0 0.0
  %326 = vmatprep.subr.mxu0 0.0
  %327 = vmatpush1.msra.mxu0 0.0
  %328 = vmatprep.mubr.f32.mxu0 0.0
  %329 = vmatmul.mubr.f32.gmra.mrb[0].mxu0 %v241
  %v330 = vpop.f32.mrb[0].mxu0
  %v331 = vadd.f32 0.0, %v330
  %v332 = vpop.f32.mrb[0].mxu0
  %333 = vmatprep.mubr.f32.mxu0 0.0
  %334 = vmatmul.mubr.f32.gmra.mrb[0].mxu0 %v244
  %v335 = vpop.f32.mrb[0].mxu0
  %v336 = vadd.f32 0.0, %v335
  %v337 = vpop.f32.mrb[0].mxu0
  %338 = vmatprep.mubr.f32.mxu0 0.0
  %339 = vmatmul.mubr.f32.gmra.mrb[0].mxu0 %v247
  %v340 = vpop.f32.mrb[0].mxu0
  %v341 = vadd.f32 0.0, %v340
  %v342 = vpop.f32.mrb[0].mxu0
  %343 = vmatprep.mubr.f32.mxu0 0.0
  %344 = vmatmul.mubr.f32.gmra.mrb[0].mxu0 %v250
  %v345 = vpop.f32.mrb[0].mxu0
  %v346 = vadd.f32 0.0, %v345
  %v347 = vpop.f32.mrb[0].mxu0
  %348 = vmatprep.mubr.f32.mxu0 0.0
  %349 = vmatmul.mubr.f32.gmra.mrb[0].mxu0 %v253
  %v350 = vpop.f32.mrb[0].mxu0
  %v351 = vadd.f32 0.0, %v350
  %v352 = vpop.f32.mrb[0].mxu0
  %353 = vmatprep.mubr.f32.mxu0 0.0
  %354 = vmatmul.mubr.f32.gmra.mrb[0].mxu0 %v256
  %v355 = vpop.f32.mrb[0].mxu0
  %v356 = vadd.f32 0.0, %v355
  %v357 = vpop.f32.mrb[0].mxu0
  %358 = vmatprep.mubr.f32.mxu0 0.0
  %359 = vmatmul.mubr.f32.gmra.mrb[0].mxu0 %v259
  %v360 = vpop.f32.mrb[0].mxu0
  %v361 = vadd.f32 0.0, %v360
  %v362 = vpop.f32.mrb[0].mxu0
  %363 = vmatprep.mubr.f32.mxu0 0.0
  %364 = vmatmul.mubr.f32.gmra.mrb[0].mxu0 %v262
  %v365 = vpop.f32.mrb[0].mxu0
  %v366 = vadd.f32 0.0, %v365
  %v367 = vpop.f32.mrb[0].mxu0
  %368 = vdwg.mxu0
  %401 = vrot.lane.b32.xlu0 %v29, 32
  %v402 = vpop.permute.xlu0 %401
  %403 = vrot.lane.b32.xlu0 %v30, 32
  %v404 = vpop.permute.xlu0 %403
  %405 = vrot.lane.b32.xlu0 %v31, 32
  %v406 = vpop.permute.xlu0 %405
  %407 = vrot.lane.b32.xlu0 %v32, 32
  %v408 = vpop.permute.xlu0 %407
  %409 = vrot.lane.b32.xlu0 %v33, 32
  %v410 = vpop.permute.xlu0 %409
  %411 = vrot.lane.b32.xlu0 %v34, 32
  %v412 = vpop.permute.xlu0 %411
  %413 = vrot.lane.b32.xlu0 %v35, 32
  %v414 = vpop.permute.xlu0 %413
  %415 = vrot.lane.b32.xlu0 %v36, 32
  %v416 = vpop.permute.xlu0 %415
  %417 = vrot.lane.b32.xlu0 %v37, 32
  %v418 = vpop.permute.xlu0 %417
  %419 = vrot.lane.b32.xlu0 %v38, 32
  %v420 = vpop.permute.xlu0 %419
  %421 = vrot.lane.b32.xlu0 %v39, 32
  %v422 = vpop.permute.xlu0 %421
  %423 = vrot.lane.b32.xlu0 %v40, 32
  %v424 = vpop.permute.xlu0 %423
  %425 = vrot.lane.b32.xlu0 %v41, 32
  %v426 = vpop.permute.xlu0 %425
  %427 = vrot.lane.b32.xlu0 %v42, 32
  %v428 = vpop.permute.xlu0 %427
  %429 = vrot.lane.b32.xlu0 %v43, 32
  %v430 = vpop.permute.xlu0 %429
  %431 = vrot.lane.b32.xlu0 %v44, 32
  %v432 = vpop.permute.xlu0 %431
  %433 = vrot.lane.b32.xlu0 %v45, 32
  %v434 = vpop.permute.xlu0 %433
  %435 = vrot.lane.b32.xlu0 %v46, 32
  %v436 = vpop.permute.xlu0 %435
  %437 = vrot.lane.b32.xlu0 %v47, 32
  %v438 = vpop.permute.xlu0 %437
  %439 = vrot.lane.b32.xlu0 %v48, 32
  %v440 = vpop.permute.xlu0 %439
  %441 = vrot.lane.b32.xlu0 %v49, 32
  %v442 = vpop.permute.xlu0 %441
  %443 = vrot.lane.b32.xlu0 %v50, 32
  %v444 = vpop.permute.xlu0 %443
  %445 = vrot.lane.b32.xlu0 %v51, 32
  %v446 = vpop.permute.xlu0 %445
  %447 = vrot.lane.b32.xlu0 %v52, 32
  %v448 = vpop.permute.xlu0 %447
  %449 = vrot.lane.b32.xlu0 %v53, 32
  %v450 = vpop.permute.xlu0 %449
  %451 = vrot.lane.b32.xlu0 %v54, 32
  %v452 = vpop.permute.xlu0 %451
  %453 = vrot.lane.b32.xlu0 %v55, 32
  %v454 = vpop.permute.xlu0 %453
  %455 = vrot.lane.b32.xlu0 %v56, 32
  %v456 = vpop.permute.xlu0 %455
  %457 = vrot.lane.b32.xlu0 %v57, 32
  %v458 = vpop.permute.xlu0 %457
  %459 = vrot.lane.b32.xlu0 %v58, 32
  %v460 = vpop.permute.xlu0 %459
  %461 = vrot.lane.b32.xlu0 %v59, 32
  %v462 = vpop.permute.xlu0 %461
  %463 = vrot.lane.b32.xlu0 %v60, 32
  %v464 = vpop.permute.xlu0 %463
  %v497 = vmul.f32 %v331, %v402
  %v498 = vmul.f32 %v336, %v404
  %v499 = vmul.f32 %v341, %v406
  %v500 = vmul.f32 %v346, %v408
  %v501 = vmul.f32 %v351, %v410
  %v502 = vmul.f32 %v356, %v412
  %v503 = vmul.f32 %v361, %v414
  %v504 = vmul.f32 %v366, %v416
  %v505 = vmul.f32 %v331, %v418
  %v506 = vmul.f32 %v336, %v420
  %v507 = vmul.f32 %v341, %v422
  %v508 = vmul.f32 %v346, %v424
  %v509 = vmul.f32 %v351, %v426
  %v510 = vmul.f32 %v356, %v428
  %v511 = vmul.f32 %v361, %v430
  %v512 = vmul.f32 %v366, %v432
  %v513 = vmul.f32 %v331, %v434
  %v514 = vmul.f32 %v336, %v436
  %v515 = vmul.f32 %v341, %v438
  %v516 = vmul.f32 %v346, %v440
  %v517 = vmul.f32 %v351, %v442
  %v518 = vmul.f32 %v356, %v444
  %v519 = vmul.f32 %v361, %v446
  %v520 = vmul.f32 %v366, %v448
  %v521 = vmul.f32 %v331, %v450
  %v522 = vmul.f32 %v336, %v452
  %v523 = vmul.f32 %v341, %v454
  %v524 = vmul.f32 %v346, %v456
  %v525 = vmul.f32 %v351, %v458
  %v526 = vmul.f32 %v356, %v460
  %v527 = vmul.f32 %v361, %v462
  %v528 = vmul.f32 %v366, %v464
  %529 = vrot.lane.b32.xlu0 %v29, 64
  %v530 = vpop.permute.xlu0 %529
  %531 = vrot.lane.b32.xlu0 %v30, 64
  %v532 = vpop.permute.xlu0 %531
  %533 = vrot.lane.b32.xlu0 %v31, 64
  %v534 = vpop.permute.xlu0 %533
  %535 = vrot.lane.b32.xlu0 %v32, 64
  %v536 = vpop.permute.xlu0 %535
  %537 = vrot.lane.b32.xlu0 %v33, 64
  %v538 = vpop.permute.xlu0 %537
  %539 = vrot.lane.b32.xlu0 %v34, 64
  %v540 = vpop.permute.xlu0 %539
  %541 = vrot.lane.b32.xlu0 %v35, 64
  %v542 = vpop.permute.xlu0 %541
  %543 = vrot.lane.b32.xlu0 %v36, 64
  %v544 = vpop.permute.xlu0 %543
  %545 = vrot.lane.b32.xlu0 %v37, 64
  %v546 = vpop.permute.xlu0 %545
  %547 = vrot.lane.b32.xlu0 %v38, 64
  %v548 = vpop.permute.xlu0 %547
  %549 = vrot.lane.b32.xlu0 %v39, 64
  %v550 = vpop.permute.xlu0 %549
  %551 = vrot.lane.b32.xlu0 %v40, 64
  %v552 = vpop.permute.xlu0 %551
  %553 = vrot.lane.b32.xlu0 %v41, 64
  %v554 = vpop.permute.xlu0 %553
  %555 = vrot.lane.b32.xlu0 %v42, 64
  %v556 = vpop.permute.xlu0 %555
  %557 = vrot.lane.b32.xlu0 %v43, 64
  %v558 = vpop.permute.xlu0 %557
  %559 = vrot.lane.b32.xlu0 %v44, 64
  %v560 = vpop.permute.xlu0 %559
  %561 = vrot.lane.b32.xlu0 %v45, 64
  %v562 = vpop.permute.xlu0 %561
  %563 = vrot.lane.b32.xlu0 %v46, 64
  %v564 = vpop.permute.xlu0 %563
  %565 = vrot.lane.b32.xlu0 %v47, 64
  %v566 = vpop.permute.xlu0 %565
  %567 = vrot.lane.b32.xlu0 %v48, 64
  %v568 = vpop.permute.xlu0 %567
  %569 = vrot.lane.b32.xlu0 %v49, 64
  %v570 = vpop.permute.xlu0 %569
  %571 = vrot.lane.b32.xlu0 %v50, 64
  %v572 = vpop.permute.xlu0 %571
  %573 = vrot.lane.b32.xlu0 %v51, 64
  %v574 = vpop.permute.xlu0 %573
  %575 = vrot.lane.b32.xlu0 %v52, 64
  %v576 = vpop.permute.xlu0 %575
  %577 = vrot.lane.b32.xlu0 %v53, 64
  %v578 = vpop.permute.xlu0 %577
  %579 = vrot.lane.b32.xlu0 %v54, 64
  %v580 = vpop.permute.xlu0 %579
  %581 = vrot.lane.b32.xlu0 %v55, 64
  %v582 = vpop.permute.xlu0 %581
  %583 = vrot.lane.b32.xlu0 %v56, 64
  %v584 = vpop.permute.xlu0 %583
  %585 = vrot.lane.b32.xlu0 %v57, 64
  %v586 = vpop.permute.xlu0 %585
  %587 = vrot.lane.b32.xlu0 %v58, 64
  %v588 = vpop.permute.xlu0 %587
  %589 = vrot.lane.b32.xlu0 %v59, 64
  %v590 = vpop.permute.xlu0 %589
  %591 = vrot.lane.b32.xlu0 %v60, 64
  %v592 = vpop.permute.xlu0 %591
  %v625 = vmul.f32 %v331, %v530
  %v626 = vmul.f32 %v336, %v532
  %v627 = vmul.f32 %v341, %v534
  %v628 = vmul.f32 %v346, %v536
  %v629 = vmul.f32 %v351, %v538
  %v630 = vmul.f32 %v356, %v540
  %v631 = vmul.f32 %v361, %v542
  %v632 = vmul.f32 %v366, %v544
  %v633 = vmul.f32 %v331, %v546
  %v634 = vmul.f32 %v336, %v548
  %v635 = vmul.f32 %v341, %v550
  %v636 = vmul.f32 %v346, %v552
  %v637 = vmul.f32 %v351, %v554
  %v638 = vmul.f32 %v356, %v556
  %v639 = vmul.f32 %v361, %v558
  %v640 = vmul.f32 %v366, %v560
  %v641 = vmul.f32 %v331, %v562
  %v642 = vmul.f32 %v336, %v564
  %v643 = vmul.f32 %v341, %v566
  %v644 = vmul.f32 %v346, %v568
  %v645 = vmul.f32 %v351, %v570
  %v646 = vmul.f32 %v356, %v572
  %v647 = vmul.f32 %v361, %v574
  %v648 = vmul.f32 %v366, %v576
  %v649 = vmul.f32 %v331, %v578
  %v650 = vmul.f32 %v336, %v580
  %v651 = vmul.f32 %v341, %v582
  %v652 = vmul.f32 %v346, %v584
  %v653 = vmul.f32 %v351, %v586
  %v654 = vmul.f32 %v356, %v588
  %v655 = vmul.f32 %v361, %v590
  %v656 = vmul.f32 %v366, %v592
  %689 = vrot.lane.b32.xlu0 %v625, 64
  %v690 = vpop.permute.xlu0 %689
  %691 = vrot.lane.b32.xlu0 %v626, 64
  %v692 = vpop.permute.xlu0 %691
  %693 = vrot.lane.b32.xlu0 %v627, 64
  %v694 = vpop.permute.xlu0 %693
  %695 = vrot.lane.b32.xlu0 %v628, 64
  %v696 = vpop.permute.xlu0 %695
  %697 = vrot.lane.b32.xlu0 %v629, 64
  %v698 = vpop.permute.xlu0 %697
  %699 = vrot.lane.b32.xlu0 %v630, 64
  %v700 = vpop.permute.xlu0 %699
  %701 = vrot.lane.b32.xlu0 %v631, 64
  %v702 = vpop.permute.xlu0 %701
  %703 = vrot.lane.b32.xlu0 %v632, 64
  %v704 = vpop.permute.xlu0 %703
  %705 = vrot.lane.b32.xlu0 %v633, 64
  %v706 = vpop.permute.xlu0 %705
  %707 = vrot.lane.b32.xlu0 %v634, 64
  %v708 = vpop.permute.xlu0 %707
  %709 = vrot.lane.b32.xlu0 %v635, 64
  %v710 = vpop.permute.xlu0 %709
  %711 = vrot.lane.b32.xlu0 %v636, 64
  %v712 = vpop.permute.xlu0 %711
  %713 = vrot.lane.b32.xlu0 %v637, 64
  %v714 = vpop.permute.xlu0 %713
  %715 = vrot.lane.b32.xlu0 %v638, 64
  %v716 = vpop.permute.xlu0 %715
  %717 = vrot.lane.b32.xlu0 %v639, 64
  %v718 = vpop.permute.xlu0 %717
  %719 = vrot.lane.b32.xlu0 %v640, 64
  %v720 = vpop.permute.xlu0 %719
  %721 = vrot.lane.b32.xlu0 %v641, 64
  %v722 = vpop.permute.xlu0 %721
  %723 = vrot.lane.b32.xlu0 %v642, 64
  %v724 = vpop.permute.xlu0 %723
  %725 = vrot.lane.b32.xlu0 %v643, 64
  %v726 = vpop.permute.xlu0 %725
  %727 = vrot.lane.b32.xlu0 %v644, 64
  %v728 = vpop.permute.xlu0 %727
  %729 = vrot.lane.b32.xlu0 %v645, 64
  %v730 = vpop.permute.xlu0 %729
  %731 = vrot.lane.b32.xlu0 %v646, 64
  %v732 = vpop.permute.xlu0 %731
  %733 = vrot.lane.b32.xlu0 %v647, 64
  %v734 = vpop.permute.xlu0 %733
  %735 = vrot.lane.b32.xlu0 %v648, 64
  %v736 = vpop.permute.xlu0 %735
  %737 = vrot.lane.b32.xlu0 %v649, 64
  %v738 = vpop.permute.xlu0 %737
  %739 = vrot.lane.b32.xlu0 %v650, 64
  %v740 = vpop.permute.xlu0 %739
  %741 = vrot.lane.b32.xlu0 %v651, 64
  %v742 = vpop.permute.xlu0 %741
  %743 = vrot.lane.b32.xlu0 %v652, 64
  %v744 = vpop.permute.xlu0 %743
  %745 = vrot.lane.b32.xlu0 %v653, 64
  %v746 = vpop.permute.xlu0 %745
  %747 = vrot.lane.b32.xlu0 %v654, 64
  %v748 = vpop.permute.xlu0 %747
  %749 = vrot.lane.b32.xlu0 %v655, 64
  %v750 = vpop.permute.xlu0 %749
  %751 = vrot.lane.b32.xlu0 %v656, 64
  %v752 = vpop.permute.xlu0 %751
  %v785 = vsel %vm239, %v690, %v402
  %v786 = vsel %vm239, %v692, %v404
  %v787 = vsel %vm239, %v694, %v406
  %v788 = vsel %vm239, %v696, %v408
  %v789 = vsel %vm239, %v698, %v410
  %v790 = vsel %vm239, %v700, %v412
  %v791 = vsel %vm239, %v702, %v414
  %v792 = vsel %vm239, %v704, %v416
  %v793 = vsel %vm239, %v706, %v418
  %v794 = vsel %vm239, %v708, %v420
  %v795 = vsel %vm239, %v710, %v422
  %v796 = vsel %vm239, %v712, %v424
  %v797 = vsel %vm239, %v714, %v426
  %v798 = vsel %vm239, %v716, %v428
  %v799 = vsel %vm239, %v718, %v430
  %v800 = vsel %vm239, %v720, %v432
  %v801 = vsel %vm239, %v722, %v434
  %v802 = vsel %vm239, %v724, %v436
  %v803 = vsel %vm239, %v726, %v438
  %v804 = vsel %vm239, %v728, %v440
  %v805 = vsel %vm239, %v730, %v442
  %v806 = vsel %vm239, %v732, %v444
  %v807 = vsel %vm239, %v734, %v446
  %v808 = vsel %vm239, %v736, %v448
  %v809 = vsel %vm239, %v738, %v450
  %v810 = vsel %vm239, %v740, %v452
  %v811 = vsel %vm239, %v742, %v454
  %v812 = vsel %vm239, %v744, %v456
  %v813 = vsel %vm239, %v746, %v458
  %v814 = vsel %vm239, %v748, %v460
  %v815 = vsel %vm239, %v750, %v462
  %v816 = vsel %vm239, %v752, %v464
  %849 = vrot.lane.b32.xlu0 %v497, 96
  %v850 = vpop.permute.xlu0 %849
  %851 = vrot.lane.b32.xlu0 %v498, 96
  %v852 = vpop.permute.xlu0 %851
  %853 = vrot.lane.b32.xlu0 %v499, 96
  %v854 = vpop.permute.xlu0 %853
  %855 = vrot.lane.b32.xlu0 %v500, 96
  %v856 = vpop.permute.xlu0 %855
  %857 = vrot.lane.b32.xlu0 %v501, 96
  %v858 = vpop.permute.xlu0 %857
  %859 = vrot.lane.b32.xlu0 %v502, 96
  %v860 = vpop.permute.xlu0 %859
  %861 = vrot.lane.b32.xlu0 %v503, 96
  %v862 = vpop.permute.xlu0 %861
  %863 = vrot.lane.b32.xlu0 %v504, 96
  %v864 = vpop.permute.xlu0 %863
  %865 = vrot.lane.b32.xlu0 %v505, 96
  %v866 = vpop.permute.xlu0 %865
  %867 = vrot.lane.b32.xlu0 %v506, 96
  %v868 = vpop.permute.xlu0 %867
  %869 = vrot.lane.b32.xlu0 %v507, 96
  %v870 = vpop.permute.xlu0 %869
  %871 = vrot.lane.b32.xlu0 %v508, 96
  %v872 = vpop.permute.xlu0 %871
  %873 = vrot.lane.b32.xlu0 %v509, 96
  %v874 = vpop.permute.xlu0 %873
  %875 = vrot.lane.b32.xlu0 %v510, 96
  %v876 = vpop.permute.xlu0 %875
  %877 = vrot.lane.b32.xlu0 %v511, 96
  %v878 = vpop.permute.xlu0 %877
  %879 = vrot.lane.b32.xlu0 %v512, 96
  %v880 = vpop.permute.xlu0 %879
  %881 = vrot.lane.b32.xlu0 %v513, 96
  %v882 = vpop.permute.xlu0 %881
  %883 = vrot.lane.b32.xlu0 %v514, 96
  %v884 = vpop.permute.xlu0 %883
  %885 = vrot.lane.b32.xlu0 %v515, 96
  %v886 = vpop.permute.xlu0 %885
  %887 = vrot.lane.b32.xlu0 %v516, 96
  %v888 = vpop.permute.xlu0 %887
  %889 = vrot.lane.b32.xlu0 %v517, 96
  %v890 = vpop.permute.xlu0 %889
  %891 = vrot.lane.b32.xlu0 %v518, 96
  %v892 = vpop.permute.xlu0 %891
  %893 = vrot.lane.b32.xlu0 %v519, 96
  %v894 = vpop.permute.xlu0 %893
  %895 = vrot.lane.b32.xlu0 %v520, 96
  %v896 = vpop.permute.xlu0 %895
  %897 = vrot.lane.b32.xlu0 %v521, 96
  %v898 = vpop.permute.xlu0 %897
  %899 = vrot.lane.b32.xlu0 %v522, 96
  %v900 = vpop.permute.xlu0 %899
  %901 = vrot.lane.b32.xlu0 %v523, 96
  %v902 = vpop.permute.xlu0 %901
  %903 = vrot.lane.b32.xlu0 %v524, 96
  %v904 = vpop.permute.xlu0 %903
  %905 = vrot.lane.b32.xlu0 %v525, 96
  %v906 = vpop.permute.xlu0 %905
  %907 = vrot.lane.b32.xlu0 %v526, 96
  %v908 = vpop.permute.xlu0 %907
  %909 = vrot.lane.b32.xlu0 %v527, 96
  %v910 = vpop.permute.xlu0 %909
  %911 = vrot.lane.b32.xlu0 %v528, 96
  %v912 = vpop.permute.xlu0 %911
  %v914 = vsel %vm239, %v331, 0
  %v917 = vsel %vm239, %v336, 0
  %v920 = vsel %vm239, %v341, 0
  %v923 = vsel %vm239, %v346, 0
  %v926 = vsel %vm239, %v351, 0
  %v929 = vsel %vm239, %v356, 0
  %v932 = vsel %vm239, %v361, 0
  %v935 = vsel %vm239, %v366, 0
  %v937 = vsel %vm239, %v850, 0
  %v939 = vsel %vm239, %v852, 0
  %v941 = vsel %vm239, %v854, 0
  %v943 = vsel %vm239, %v856, 0
  %v945 = vsel %vm239, %v858, 0
  %v947 = vsel %vm239, %v860, 0
  %v949 = vsel %vm239, %v862, 0
  %v951 = vsel %vm239, %v864, 0
  %v953 = vsel %vm239, %v866, 0
  %v955 = vsel %vm239, %v868, 0
  %v957 = vsel %vm239, %v870, 0
  %v959 = vsel %vm239, %v872, 0
  %v961 = vsel %vm239, %v874, 0
  %v963 = vsel %vm239, %v876, 0
  %v965 = vsel %vm239, %v878, 0
  %v967 = vsel %vm239, %v880, 0
  %v969 = vsel %vm239, %v882, 0
  %v971 = vsel %vm239, %v884, 0
  %v973 = vsel %vm239, %v886, 0
  %v975 = vsel %vm239, %v888, 0
  %v977 = vsel %vm239, %v890, 0
  %v979 = vsel %vm239, %v892, 0
  %v981 = vsel %vm239, %v894, 0
  %v983 = vsel %vm239, %v896, 0
  %v985 = vsel %vm239, %v898, 0
  %v987 = vsel %vm239, %v900, 0
  %v989 = vsel %vm239, %v902, 0
  %v991 = vsel %vm239, %v904, 0
  %v993 = vsel %vm239, %v906, 0
  %v995 = vsel %vm239, %v908, 0
  %v997 = vsel %vm239, %v910, 0
  %v999 = vsel %vm239, %v912, 0
  %1001 = vmatprep.subr.mxu0 0.0
  %1002 = vmatpush1.xpose.msra.mxu0 %v937
  %1003 = vmatprep.subr.mxu0 0.0
  %1004 = vmatpush1.xpose.msra.mxu0 %v939
  %1005 = vmatprep.subr.mxu0 0.0
  %1006 = vmatpush1.xpose.msra.mxu0 %v941
  %1007 = vmatprep.subr.mxu0 0.0
  %1008 = vmatpush1.xpose.msra.mxu0 %v943
  %1009 = vmatprep.subr.mxu0 0.0
  %1010 = vmatpush1.xpose.msra.mxu0 %v945
  %1011 = vmatprep.subr.mxu0 0.0
  %1012 = vmatpush1.xpose.msra.mxu0 %v947
  %1013 = vmatprep.subr.mxu0 0.0
  %1014 = vmatpush1.xpose.msra.mxu0 %v949
  %1015 = vmatprep.subr.mxu0 0.0
  %1016 = vmatpush1.xpose.msra.mxu0 %v951
  %1017 = vmatprep.subr.mxu0 0.0
  %1018 = vmatpush1.xpose.msra.mxu0 %v953
  %1019 = vmatprep.subr.mxu0 0.0
  %1020 = vmatpush1.xpose.msra.mxu0 %v955
  %1021 = vmatprep.subr.mxu0 0.0
  %1022 = vmatpush1.xpose.msra.mxu0 %v957
  %1023 = vmatprep.subr.mxu0 0.0
  %1024 = vmatpush1.xpose.msra.mxu0 %v959
  %1025 = vmatprep.subr.mxu0 0.0
  %1026 = vmatpush1.xpose.msra.mxu0 %v961
  %1027 = vmatprep.subr.mxu0 0.0
  %1028 = vmatpush1.xpose.msra.mxu0 %v963
  %1029 = vmatprep.subr.mxu0 0.0
  %1030 = vmatpush1.xpose.msra.mxu0 %v965
  %1031 = vmatprep.subr.mxu0 0.0
  %1032 = vmatpush1.xpose.msra.mxu0 %v967
  %1033 = vmatprep.subr.mxu0 0.0
  %1034 = vmatpush1.xpose.msra.mxu0 %v969
  %1035 = vmatprep.subr.mxu0 0.0
  %1036 = vmatpush1.xpose.msra.mxu0 %v971
  %1037 = vmatprep.subr.mxu0 0.0
  %1038 = vmatpush1.xpose.msra.mxu0 %v973
  %1039 = vmatprep.subr.mxu0 0.0
  %1040 = vmatpush1.xpose.msra.mxu0 %v975
  %1041 = vmatprep.subr.mxu0 0.0
  %1042 = vmatpush1.xpose.msra.mxu0 %v977
  %1043 = vmatprep.subr.mxu0 0.0
  %1044 = vmatpush1.xpose.msra.mxu0 %v979
  %1045 = vmatprep.subr.mxu0 0.0
  %1046 = vmatpush1.xpose.msra.mxu0 %v981
  %1047 = vmatprep.subr.mxu0 0.0
  %1048 = vmatpush1.xpose.msra.mxu0 %v983
  %1049 = vmatprep.subr.mxu0 0.0
  %1050 = vmatpush1.xpose.msra.mxu0 %v985
  %1051 = vmatprep.subr.mxu0 0.0
  %1052 = vmatpush1.xpose.msra.mxu0 %v987
  %1053 = vmatprep.subr.mxu0 0.0
  %1054 = vmatpush1.xpose.msra.mxu0 %v989
  %1055 = vmatprep.subr.mxu0 0.0
  %1056 = vmatpush1.xpose.msra.mxu0 %v991
  %1057 = vmatprep.subr.mxu0 0.0
  %1058 = vmatpush1.xpose.msra.mxu0 %v993
  %1059 = vmatprep.subr.mxu0 0.0
  %1060 = vmatpush1.xpose.msra.mxu0 %v995
  %1061 = vmatprep.subr.mxu0 0.0
  %1062 = vmatpush1.xpose.msra.mxu0 %v997
  %1063 = vmatprep.subr.mxu0 0.0
  %1064 = vmatpush1.xpose.msra.mxu0 %v999
  %1065 = vmatprep.mubr.f32.mxu0 0.0
  %1066 = vmatmul.mubr.f32.gmra.mrb[0].mxu0 %v914
  %v1067 = vpop.f32.mrb[0].mxu0
  %v1068 = vadd.f32 0.0, %v1067
  %v1069 = vpop.f32.mrb[0].mxu0
  %v1070 = vadd.f32 0.0, %v1069
  %1071 = vmatprep.mubr.f32.mxu0 0.0
  %1072 = vmatmul.mubr.f32.gmra.mrb[0].mxu0 %v917
  %v1073 = vpop.f32.mrb[0].mxu0
  %v1074 = vadd.f32 0.0, %v1073
  %v1075 = vpop.f32.mrb[0].mxu0
  %v1076 = vadd.f32 0.0, %v1075
  %1077 = vmatprep.mubr.f32.mxu0 0.0
  %1078 = vmatmul.mubr.f32.gmra.mrb[0].mxu0 %v920
  %v1079 = vpop.f32.mrb[0].mxu0
  %v1080 = vadd.f32 0.0, %v1079
  %v1081 = vpop.f32.mrb[0].mxu0
  %v1082 = vadd.f32 0.0, %v1081
  %1083 = vmatprep.mubr.f32.mxu0 0.0
  %1084 = vmatmul.mubr.f32.gmra.mrb[0].mxu0 %v923
  %v1085 = vpop.f32.mrb[0].mxu0
  %v1086 = vadd.f32 0.0, %v1085
  %v1087 = vpop.f32.mrb[0].mxu0
  %v1088 = vadd.f32 0.0, %v1087
  %1089 = vmatprep.mubr.f32.mxu0 0.0
  %1090 = vmatmul.mubr.f32.gmra.mrb[0].mxu0 %v926
  %v1091 = vpop.f32.mrb[0].mxu0
  %v1092 = vadd.f32 0.0, %v1091
  %v1093 = vpop.f32.mrb[0].mxu0
  %v1094 = vadd.f32 0.0, %v1093
  %1095 = vmatprep.mubr.f32.mxu0 0.0
  %1096 = vmatmul.mubr.f32.gmra.mrb[0].mxu0 %v929
  %v1097 = vpop.f32.mrb[0].mxu0
  %v1098 = vadd.f32 0.0, %v1097
  %v1099 = vpop.f32.mrb[0].mxu0
  %v1100 = vadd.f32 0.0, %v1099
  %1101 = vmatprep.mubr.f32.mxu0 0.0
  %1102 = vmatmul.mubr.f32.gmra.mrb[0].mxu0 %v932
  %v1103 = vpop.f32.mrb[0].mxu0
  %v1104 = vadd.f32 0.0, %v1103
  %v1105 = vpop.f32.mrb[0].mxu0
  %v1106 = vadd.f32 0.0, %v1105
  %1107 = vmatprep.mubr.f32.mxu0 0.0
  %1108 = vmatmul.mubr.f32.gmra.mrb[0].mxu0 %v935
  %v1109 = vpop.f32.mrb[0].mxu0
  %v1110 = vadd.f32 0.0, %v1109
  %v1111 = vpop.f32.mrb[0].mxu0
  %v1112 = vadd.f32 0.0, %v1111
  %1113 = vdwg.mxu0
  %v1114 = vmax.f32 %v1068, -10.0
  %v1115 = vmax.f32 %v1070, -10.0
  %v1116 = vmax.f32 %v1074, -10.0
  %v1117 = vmax.f32 %v1076, -10.0
  %v1118 = vmax.f32 %v1080, -10.0
  %v1119 = vmax.f32 %v1082, -10.0
  %v1120 = vmax.f32 %v1086, -10.0
  %v1121 = vmax.f32 %v1088, -10.0
  %v1122 = vmax.f32 %v1092, -10.0
  %v1123 = vmax.f32 %v1094, -10.0
  %v1124 = vmax.f32 %v1098, -10.0
  %v1125 = vmax.f32 %v1100, -10.0
  %v1126 = vmax.f32 %v1104, -10.0
  %v1127 = vmax.f32 %v1106, -10.0
  %v1128 = vmax.f32 %v1110, -10.0
  %v1129 = vmax.f32 %v1112, -10.0
  %v1130 = vmin.f32 %v1114, 10.0
  %v1131 = vmin.f32 %v1115, 10.0
  %v1132 = vmin.f32 %v1116, 10.0
  %v1133 = vmin.f32 %v1117, 10.0
  %v1134 = vmin.f32 %v1118, 10.0
  %v1135 = vmin.f32 %v1119, 10.0
  %v1136 = vmin.f32 %v1120, 10.0
  %v1137 = vmin.f32 %v1121, 10.0
  %v1138 = vmin.f32 %v1122, 10.0
  %v1139 = vmin.f32 %v1123, 10.0
  %v1140 = vmin.f32 %v1124, 10.0
  %v1141 = vmin.f32 %v1125, 10.0
  %v1142 = vmin.f32 %v1126, 10.0
  %v1143 = vmin.f32 %v1127, 10.0
  %v1144 = vmin.f32 %v1128, 10.0
  %v1145 = vmin.f32 %v1129, 10.0
  %v1146 = vmul.f32 %v1130, 1.442695
  %v1147 = vpow.pop %v1146
  %v1148 = vmul.f32 %v1131, 1.442695
  %v1149 = vpow.pop %v1148
  %v1150 = vmul.f32 %v1132, 1.442695
  %v1151 = vpow.pop %v1150
  %v1152 = vmul.f32 %v1133, 1.442695
  %v1153 = vpow.pop %v1152
  %v1154 = vmul.f32 %v1134, 1.442695
  %v1155 = vpow.pop %v1154
  %v1156 = vmul.f32 %v1135, 1.442695
  %v1157 = vpow.pop %v1156
  %v1158 = vmul.f32 %v1136, 1.442695
  %v1159 = vpow.pop %v1158
  %v1160 = vmul.f32 %v1137, 1.442695
  %v1161 = vpow.pop %v1160
  %v1162 = vmul.f32 %v1138, 1.442695
  %v1163 = vpow.pop %v1162
  %v1164 = vmul.f32 %v1139, 1.442695
  %v1165 = vpow.pop %v1164
  %v1166 = vmul.f32 %v1140, 1.442695
  %v1167 = vpow.pop %v1166
  %v1168 = vmul.f32 %v1141, 1.442695
  %v1169 = vpow.pop %v1168
  %v1170 = vmul.f32 %v1142, 1.442695
  %v1171 = vpow.pop %v1170
  %v1172 = vmul.f32 %v1143, 1.442695
  %v1173 = vpow.pop %v1172
  %v1174 = vmul.f32 %v1144, 1.442695
  %v1175 = vpow.pop %v1174
  %v1176 = vmul.f32 %v1145, 1.442695
  %v1177 = vpow.pop %v1176
  %v1178 = vsel %vm102, %v1147, 0.0
  %v1179 = vsel %vm102, %v1149, 0.0
  %v1180 = vsel %vm103, %v1151, 0.0
  %v1181 = vsel %vm103, %v1153, 0.0
  %v1182 = vsel %vm104, %v1155, 0.0
  %v1183 = vsel %vm104, %v1157, 0.0
  %v1184 = vsel %vm105, %v1159, 0.0
  %v1185 = vsel %vm105, %v1161, 0.0
  %v1186 = vsel %vm106, %v1163, 0.0
  %v1187 = vsel %vm106, %v1165, 0.0
  %v1188 = vsel %vm107, %v1167, 0.0
  %v1189 = vsel %vm107, %v1169, 0.0
  %v1190 = vsel %vm108, %v1171, 0.0
  %v1191 = vsel %vm108, %v1173, 0.0
  %v1192 = vsel %vm109, %v1175, 0.0
  %v1193 = vsel %vm109, %v1177, 0.0
  %1194 = vmatprep.subr.mxu0 0.0
  %1195 = vmatpush1.msra.mxu0 %v785
  %1196 = vmatprep.subr.mxu0 0.0
  %1197 = vmatpush1.msra.mxu0 %v786
  %1198 = vmatprep.subr.mxu0 0.0
  %1199 = vmatpush1.msra.mxu0 %v787
  %1200 = vmatprep.subr.mxu0 0.0
  %1201 = vmatpush1.msra.mxu0 %v788
  %1202 = vmatprep.subr.mxu0 0.0
  %1203 = vmatpush1.msra.mxu0 %v789
  %1204 = vmatprep.subr.mxu0 0.0
  %1205 = vmatpush1.msra.mxu0 %v790
  %1206 = vmatprep.subr.mxu0 0.0
  %1207 = vmatpush1.msra.mxu0 %v791
  %1208 = vmatprep.subr.mxu0 0.0
  %1209 = vmatpush1.msra.mxu0 %v792
  %1210 = vmatprep.subr.mxu0 0.0
  %1211 = vmatpush1.msra.mxu0 %v793
  %1212 = vmatprep.subr.mxu0 0.0
  %1213 = vmatpush1.msra.mxu0 %v794
  %1214 = vmatprep.subr.mxu0 0.0
  %1215 = vmatpush1.msra.mxu0 %v795
  %1216 = vmatprep.subr.mxu0 0.0
  %1217 = vmatpush1.msra.mxu0 %v796
  %1218 = vmatprep.subr.mxu0 0.0
  %1219 = vmatpush1.msra.mxu0 %v797
  %1220 = vmatprep.subr.mxu0 0.0
  %1221 = vmatpush1.msra.mxu0 %v798
  %1222 = vmatprep.subr.mxu0 0.0
  %1223 = vmatpush1.msra.mxu0 %v799
  %1224 = vmatprep.subr.mxu0 0.0
  %1225 = vmatpush1.msra.mxu0 %v800
  %1226 = vmatprep.subr.mxu0 0.0
  %1227 = vmatpush1.msra.mxu0 %v801
  %1228 = vmatprep.subr.mxu0 0.0
  %1229 = vmatpush1.msra.mxu0 %v802
  %1230 = vmatprep.subr.mxu0 0.0
  %1231 = vmatpush1.msra.mxu0 %v803
  %1232 = vmatprep.subr.mxu0 0.0
  %1233 = vmatpush1.msra.mxu0 %v804
  %1234 = vmatprep.subr.mxu0 0.0
  %1235 = vmatpush1.msra.mxu0 %v805
  %1236 = vmatprep.subr.mxu0 0.0
  %1237 = vmatpush1.msra.mxu0 %v806
  %1238 = vmatprep.subr.mxu0 0.0
  %1239 = vmatpush1.msra.mxu0 %v807
  %1240 = vmatprep.subr.mxu0 0.0
  %1241 = vmatpush1.msra.mxu0 %v808
  %1242 = vmatprep.subr.mxu0 0.0
  %1243 = vmatpush1.msra.mxu0 %v809
  %1244 = vmatprep.subr.mxu0 0.0
  %1245 = vmatpush1.msra.mxu0 %v810
  %1246 = vmatprep.subr.mxu0 0.0
  %1247 = vmatpush1.msra.mxu0 %v811
  %1248 = vmatprep.subr.mxu0 0.0
  %1249 = vmatpush1.msra.mxu0 %v812
  %1250 = vmatprep.subr.mxu0 0.0
  %1251 = vmatpush1.msra.mxu0 %v813
  %1252 = vmatprep.subr.mxu0 0.0
  %1253 = vmatpush1.msra.mxu0 %v814
  %1254 = vmatprep.subr.mxu0 0.0
  %1255 = vmatpush1.msra.mxu0 %v815
  %1256 = vmatprep.subr.mxu0 0.0
  %1257 = vmatpush1.msra.mxu0 %v816
  %1258 = vmatprep.mubr.f32.mxu0 %v1179
  %1259 = vmatmul.mubr.f32.gmra.mrb[0].mxu0 %v1178
  %v1260 = vpop.f32.mrb[0].mxu0
  %v1261 = vadd.f32 0.0, %v1260
  %v1262 = vpop.f32.mrb[0].mxu0
  %1263 = vmatprep.mubr.f32.mxu0 %v1181
  %1264 = vmatmul.mubr.f32.gmra.mrb[0].mxu0 %v1180
  %v1265 = vpop.f32.mrb[0].mxu0
  %v1266 = vadd.f32 0.0, %v1265
  %v1267 = vpop.f32.mrb[0].mxu0
  %1268 = vmatprep.mubr.f32.mxu0 %v1183
  %1269 = vmatmul.mubr.f32.gmra.mrb[0].mxu0 %v1182
  %v1270 = vpop.f32.mrb[0].mxu0
  %v1271 = vadd.f32 0.0, %v1270
  %v1272 = vpop.f32.mrb[0].mxu0
  %1273 = vmatprep.mubr.f32.mxu0 %v1185
  %1274 = vmatmul.mubr.f32.gmra.mrb[0].mxu0 %v1184
  %v1275 = vpop.f32.mrb[0].mxu0
  %v1276 = vadd.f32 0.0, %v1275
  %v1277 = vpop.f32.mrb[0].mxu0
  %1278 = vmatprep.mubr.f32.mxu0 %v1187
  %1279 = vmatmul.mubr.f32.gmra.mrb[0].mxu0 %v1186
  %v1280 = vpop.f32.mrb[0].mxu0
  %v1281 = vadd.f32 0.0, %v1280
  %v1282 = vpop.f32.mrb[0].mxu0
  %1283 = vmatprep.mubr.f32.mxu0 %v1189
  %1284 = vmatmul.mubr.f32.gmra.mrb[0].mxu0 %v1188
  %v1285 = vpop.f32.mrb[0].mxu0
  %v1286 = vadd.f32 0.0, %v1285
  %v1287 = vpop.f32.mrb[0].mxu0
  %1288 = vmatprep.mubr.f32.mxu0 %v1191
  %1289 = vmatmul.mubr.f32.gmra.mrb[0].mxu0 %v1190
  %v1290 = vpop.f32.mrb[0].mxu0
  %v1291 = vadd.f32 0.0, %v1290
  %v1292 = vpop.f32.mrb[0].mxu0
  %1293 = vmatprep.mubr.f32.mxu0 %v1193
  %1294 = vmatmul.mubr.f32.gmra.mrb[0].mxu0 %v1192
  %v1295 = vpop.f32.mrb[0].mxu0
  %v1296 = vadd.f32 0.0, %v1295
  %v1297 = vpop.f32.mrb[0].mxu0
  %1298 = vdwg.mxu0
  %v1299 = vadd.f32 %v1261, 1e-08
  %v1300 = vadd.f32 %v1266, 1e-08
  %v1301 = vadd.f32 %v1271, 1e-08
  %v1302 = vadd.f32 %v1276, 1e-08
  %v1303 = vadd.f32 %v1281, 1e-08
  %v1304 = vadd.f32 %v1286, 1e-08
  %v1305 = vadd.f32 %v1291, 1e-08
  %v1306 = vadd.f32 %v1296, 1e-08
  %v1307 = vrcp.pop %v1299
  %v1308 = vrcp.pop %v1300
  %v1309 = vrcp.pop %v1301
  %v1310 = vrcp.pop %v1302
  %v1311 = vrcp.pop %v1303
  %v1312 = vrcp.pop %v1304
  %v1313 = vrcp.pop %v1305
  %v1314 = vrcp.pop %v1306
  %1323 = vrot.lane.b32.xlu0 %v1307, 96
  %v1324 = vpop.permute.xlu0 %1323
  %1325 = vrot.lane.b32.xlu0 %v1308, 96
  %v1326 = vpop.permute.xlu0 %1325
  %1327 = vrot.lane.b32.xlu0 %v1309, 96
  %v1328 = vpop.permute.xlu0 %1327
  %1329 = vrot.lane.b32.xlu0 %v1310, 96
  %v1330 = vpop.permute.xlu0 %1329
  %1331 = vrot.lane.b32.xlu0 %v1311, 96
  %v1332 = vpop.permute.xlu0 %1331
  %1333 = vrot.lane.b32.xlu0 %v1312, 96
  %v1334 = vpop.permute.xlu0 %1333
  %1335 = vrot.lane.b32.xlu0 %v1313, 96
  %v1336 = vpop.permute.xlu0 %1335
  %1337 = vrot.lane.b32.xlu0 %v1314, 96
  %v1338 = vpop.permute.xlu0 %1337
  %v1347 = vmul.f32 %v1261, %v1324
  %v1348 = vmul.f32 %v1266, %v1326
  %v1349 = vmul.f32 %v1271, %v1328
  %v1350 = vmul.f32 %v1276, %v1330
  %v1351 = vmul.f32 %v1281, %v1332
  %v1352 = vmul.f32 %v1286, %v1334
  %v1353 = vmul.f32 %v1291, %v1336
  %v1354 = vmul.f32 %v1296, %v1338
  %v1355 = vadd.f32 %v110, %v201
  %v1356 = vadd.f32 %v111, %v206
  %v1357 = vadd.f32 %v112, %v211
  %v1358 = vadd.f32 %v113, %v216
  %v1359 = vadd.f32 %v114, %v221
  %v1360 = vadd.f32 %v115, %v226
  %v1361 = vadd.f32 %v116, %v231
  %v1362 = vadd.f32 %v117, %v236
  %v1363 = vadd.f32 %v1355, %v1347
  %v1364 = vadd.f32 %v1356, %v1348
  %v1365 = vadd.f32 %v1357, %v1349
  %v1366 = vadd.f32 %v1358, %v1350
  %v1367 = vadd.f32 %v1359, %v1351
  %v1368 = vadd.f32 %v1360, %v1352
  %v1369 = vadd.f32 %v1361, %v1353
  %v1370 = vadd.f32 %v1362, %v1354
  %1371 = vmatprep.subr.mxu0 0.0
  %1372 = vmatpush1.msra.mxu0 %v1347
  %1373 = vmatprep.subr.mxu0 0.0
  %1374 = vmatpush1.msra.mxu0 %v1348
  %1375 = vmatprep.subr.mxu0 0.0
  %1376 = vmatpush1.msra.mxu0 %v1349
  %1377 = vmatprep.subr.mxu0 0.0
  %1378 = vmatpush1.msra.mxu0 %v1350
  %1379 = vmatprep.subr.mxu0 0.0
  %1380 = vmatpush1.msra.mxu0 %v1351
  %1381 = vmatprep.subr.mxu0 0.0
  %1382 = vmatpush1.msra.mxu0 %v1352
  %1383 = vmatprep.subr.mxu0 0.0
  %1384 = vmatpush1.msra.mxu0 %v1353
  %1385 = vmatprep.subr.mxu0 0.0
  %1386 = vmatpush1.msra.mxu0 %v1354
  %1387 = vmatprep.subr.mxu0 0.0
  %1388 = vmatpush1.msra.mxu0 0.0
  %1389 = vmatprep.subr.mxu0 0.0
  %1390 = vmatpush1.msra.mxu0 0.0
  %1391 = vmatprep.subr.mxu0 0.0
  %1392 = vmatpush1.msra.mxu0 0.0
  %1393 = vmatprep.subr.mxu0 0.0
  %1394 = vmatpush1.msra.mxu0 0.0
  %1395 = vmatprep.subr.mxu0 0.0
  %1396 = vmatpush1.msra.mxu0 0.0
  %1397 = vmatprep.subr.mxu0 0.0
  %1398 = vmatpush1.msra.mxu0 0.0
  %1399 = vmatprep.subr.mxu0 0.0
  %1400 = vmatpush1.msra.mxu0 0.0
  %1401 = vmatprep.subr.mxu0 0.0
  %1402 = vmatpush1.msra.mxu0 0.0
  %1403 = vmatprep.subr.mxu0 0.0
  %1404 = vmatpush1.msra.mxu0 0.0
  %1405 = vmatprep.subr.mxu0 0.0
  %1406 = vmatpush1.msra.mxu0 0.0
  %1407 = vmatprep.subr.mxu0 0.0
  %1408 = vmatpush1.msra.mxu0 0.0
  %1409 = vmatprep.subr.mxu0 0.0
  %1410 = vmatpush1.msra.mxu0 0.0
  %1411 = vmatprep.subr.mxu0 0.0
  %1412 = vmatpush1.msra.mxu0 0.0
  %1413 = vmatprep.subr.mxu0 0.0
  %1414 = vmatpush1.msra.mxu0 0.0
  %1415 = vmatprep.subr.mxu0 0.0
  %1416 = vmatpush1.msra.mxu0 0.0
  %1417 = vmatprep.subr.mxu0 0.0
  %1418 = vmatpush1.msra.mxu0 0.0
  %1419 = vmatprep.subr.mxu0 0.0
  %1420 = vmatpush1.msra.mxu0 0.0
  %1421 = vmatprep.subr.mxu0 0.0
  %1422 = vmatpush1.msra.mxu0 0.0
  %1423 = vmatprep.subr.mxu0 0.0
  %1424 = vmatpush1.msra.mxu0 0.0
  %1425 = vmatprep.subr.mxu0 0.0
  %1426 = vmatpush1.msra.mxu0 0.0
  %1427 = vmatprep.subr.mxu0 0.0
  %1428 = vmatpush1.msra.mxu0 0.0
  %1429 = vmatprep.subr.mxu0 0.0
  %1430 = vmatpush1.msra.mxu0 0.0
  %1431 = vmatprep.subr.mxu0 0.0
  %1432 = vmatpush1.msra.mxu0 0.0
  %1433 = vmatprep.subr.mxu0 0.0
  %1434 = vmatpush1.msra.mxu0 0.0
  %1435 = vmatprep.mubr.f32.mxu0 0.0
  %1436 = vmatmul.mubr.f32.gmra.mrb[0].mxu0 %v118
  %v1437 = vpop.f32.mrb[0].mxu0
  %v1438 = vadd.f32 0.0, %v1437
  %v1439 = vpop.f32.mrb[0].mxu0
  %1440 = vmatprep.mubr.f32.mxu0 0.0
  %1441 = vmatmul.mubr.f32.gmra.mrb[0].mxu0 %v120
  %v1442 = vpop.f32.mrb[0].mxu0
  %v1443 = vadd.f32 0.0, %v1442
  %v1444 = vpop.f32.mrb[0].mxu0
  %1445 = vmatprep.mubr.f32.mxu0 0.0
  %1446 = vmatmul.mubr.f32.gmra.mrb[0].mxu0 %v122
  %v1447 = vpop.f32.mrb[0].mxu0
  %v1448 = vadd.f32 0.0, %v1447
  %v1449 = vpop.f32.mrb[0].mxu0
  %1450 = vmatprep.mubr.f32.mxu0 0.0
  %1451 = vmatmul.mubr.f32.gmra.mrb[0].mxu0 %v124
  %v1452 = vpop.f32.mrb[0].mxu0
  %v1453 = vadd.f32 0.0, %v1452
  %v1454 = vpop.f32.mrb[0].mxu0
  %1455 = vmatprep.mubr.f32.mxu0 0.0
  %1456 = vmatmul.mubr.f32.gmra.mrb[0].mxu0 %v126
  %v1457 = vpop.f32.mrb[0].mxu0
  %v1458 = vadd.f32 0.0, %v1457
  %v1459 = vpop.f32.mrb[0].mxu0
  %1460 = vmatprep.mubr.f32.mxu0 0.0
  %1461 = vmatmul.mubr.f32.gmra.mrb[0].mxu0 %v128
  %v1462 = vpop.f32.mrb[0].mxu0
  %v1463 = vadd.f32 0.0, %v1462
  %v1464 = vpop.f32.mrb[0].mxu0
  %1465 = vmatprep.mubr.f32.mxu0 0.0
  %1466 = vmatmul.mubr.f32.gmra.mrb[0].mxu0 %v130
  %v1467 = vpop.f32.mrb[0].mxu0
  %v1468 = vadd.f32 0.0, %v1467
  %v1469 = vpop.f32.mrb[0].mxu0
  %1470 = vmatprep.mubr.f32.mxu0 0.0
  %1471 = vmatmul.mubr.f32.gmra.mrb[0].mxu0 %v132
  %v1472 = vpop.f32.mrb[0].mxu0
  %v1473 = vadd.f32 0.0, %v1472
  %v1474 = vpop.f32.mrb[0].mxu0
  %1475 = vdwg.mxu0
  %v1477 = vsel %vm239, %v1438, 0
  %v1480 = vsel %vm239, %v1443, 0
  %v1483 = vsel %vm239, %v1448, 0
  %v1486 = vsel %vm239, %v1453, 0
  %v1489 = vsel %vm239, %v1458, 0
  %v1492 = vsel %vm239, %v1463, 0
  %v1495 = vsel %vm239, %v1468, 0
  %v1498 = vsel %vm239, %v1473, 0
  %1500 = vmatprep.subr.mxu0 0.0
  %1501 = vmatpush1.msra.mxu0 %v25
  %1502 = vmatprep.subr.mxu0 0.0
  %1503 = vmatpush1.msra.mxu0 %v26
  %1504 = vmatprep.subr.mxu0 0.0
  %1505 = vmatpush1.msra.mxu0 %v27
  %1506 = vmatprep.subr.mxu0 0.0
  %1507 = vmatpush1.msra.mxu0 %v28
  %1508 = vmatprep.subr.mxu0 0.0
  %1509 = vmatpush1.msra.mxu0 0.0
  %1510 = vmatprep.subr.mxu0 0.0
  %1511 = vmatpush1.msra.mxu0 0.0
  %1512 = vmatprep.subr.mxu0 0.0
  %1513 = vmatpush1.msra.mxu0 0.0
  %1514 = vmatprep.subr.mxu0 0.0
  %1515 = vmatpush1.msra.mxu0 0.0
  %1516 = vmatprep.subr.mxu0 0.0
  %1517 = vmatpush1.msra.mxu0 0.0
  %1518 = vmatprep.subr.mxu0 0.0
  %1519 = vmatpush1.msra.mxu0 0.0
  %1520 = vmatprep.subr.mxu0 0.0
  %1521 = vmatpush1.msra.mxu0 0.0
  %1522 = vmatprep.subr.mxu0 0.0
  %1523 = vmatpush1.msra.mxu0 0.0
  %1524 = vmatprep.subr.mxu0 0.0
  %1525 = vmatpush1.msra.mxu0 0.0
  %1526 = vmatprep.subr.mxu0 0.0
  %1527 = vmatpush1.msra.mxu0 0.0
  %1528 = vmatprep.subr.mxu0 0.0
  %1529 = vmatpush1.msra.mxu0 0.0
  %1530 = vmatprep.subr.mxu0 0.0
  %1531 = vmatpush1.msra.mxu0 0.0
  %1532 = vmatprep.subr.mxu0 0.0
  %1533 = vmatpush1.msra.mxu0 0.0
  %1534 = vmatprep.subr.mxu0 0.0
  %1535 = vmatpush1.msra.mxu0 0.0
  %1536 = vmatprep.subr.mxu0 0.0
  %1537 = vmatpush1.msra.mxu0 0.0
  %1538 = vmatprep.subr.mxu0 0.0
  %1539 = vmatpush1.msra.mxu0 0.0
  %1540 = vmatprep.subr.mxu0 0.0
  %1541 = vmatpush1.msra.mxu0 0.0
  %1542 = vmatprep.subr.mxu0 0.0
  %1543 = vmatpush1.msra.mxu0 0.0
  %1544 = vmatprep.subr.mxu0 0.0
  %1545 = vmatpush1.msra.mxu0 0.0
  %1546 = vmatprep.subr.mxu0 0.0
  %1547 = vmatpush1.msra.mxu0 0.0
  %1548 = vmatprep.subr.mxu0 0.0
  %1549 = vmatpush1.msra.mxu0 0.0
  %1550 = vmatprep.subr.mxu0 0.0
  %1551 = vmatpush1.msra.mxu0 0.0
  %1552 = vmatprep.subr.mxu0 0.0
  %1553 = vmatpush1.msra.mxu0 0.0
  %1554 = vmatprep.subr.mxu0 0.0
  %1555 = vmatpush1.msra.mxu0 0.0
  %1556 = vmatprep.subr.mxu0 0.0
  %1557 = vmatpush1.msra.mxu0 0.0
  %1558 = vmatprep.subr.mxu0 0.0
  %1559 = vmatpush1.msra.mxu0 0.0
  %1560 = vmatprep.subr.mxu0 0.0
  %1561 = vmatpush1.msra.mxu0 0.0
  %1562 = vmatprep.subr.mxu0 0.0
  %1563 = vmatpush1.msra.mxu0 0.0
  %1564 = vmatprep.mubr.f32.mxu0 0.0
  %1565 = vmatmul.mubr.f32.gmra.mrb[0].mxu0 %v1477
  %v1566 = vpop.f32.mrb[0].mxu0
  %v1567 = vadd.f32 0.0, %v1566
  %v1568 = vpop.f32.mrb[0].mxu0
  %1569 = vmatprep.mubr.f32.mxu0 0.0
  %1570 = vmatmul.mubr.f32.gmra.mrb[0].mxu0 %v1480
  %v1571 = vpop.f32.mrb[0].mxu0
  %v1572 = vadd.f32 0.0, %v1571
  %v1573 = vpop.f32.mrb[0].mxu0
  %1574 = vmatprep.mubr.f32.mxu0 0.0
  %1575 = vmatmul.mubr.f32.gmra.mrb[0].mxu0 %v1483
  %v1576 = vpop.f32.mrb[0].mxu0
  %v1577 = vadd.f32 0.0, %v1576
  %v1578 = vpop.f32.mrb[0].mxu0
  %1579 = vmatprep.mubr.f32.mxu0 0.0
  %1580 = vmatmul.mubr.f32.gmra.mrb[0].mxu0 %v1486
  %v1581 = vpop.f32.mrb[0].mxu0
  %v1582 = vadd.f32 0.0, %v1581
  %v1583 = vpop.f32.mrb[0].mxu0
  %1584 = vmatprep.mubr.f32.mxu0 0.0
  %1585 = vmatmul.mubr.f32.gmra.mrb[0].mxu0 %v1489
  %v1586 = vpop.f32.mrb[0].mxu0
  %v1587 = vadd.f32 0.0, %v1586
  %v1588 = vpop.f32.mrb[0].mxu0
  %1589 = vmatprep.mubr.f32.mxu0 0.0
  %1590 = vmatmul.mubr.f32.gmra.mrb[0].mxu0 %v1492
  %v1591 = vpop.f32.mrb[0].mxu0
  %v1592 = vadd.f32 0.0, %v1591
  %v1593 = vpop.f32.mrb[0].mxu0
  %1594 = vmatprep.mubr.f32.mxu0 0.0
  %1595 = vmatmul.mubr.f32.gmra.mrb[0].mxu0 %v1495
  %v1596 = vpop.f32.mrb[0].mxu0
  %v1597 = vadd.f32 0.0, %v1596
  %v1598 = vpop.f32.mrb[0].mxu0
  %1599 = vmatprep.mubr.f32.mxu0 0.0
  %1600 = vmatmul.mubr.f32.gmra.mrb[0].mxu0 %v1498
  %v1601 = vpop.f32.mrb[0].mxu0
  %v1602 = vadd.f32 0.0, %v1601
  %v1603 = vpop.f32.mrb[0].mxu0
  %1604 = vdwg.mxu0
  %v1605 = vmul.f32 %v1567, %v402
  %v1606 = vmul.f32 %v1572, %v404
  %v1607 = vmul.f32 %v1577, %v406
  %v1608 = vmul.f32 %v1582, %v408
  %v1609 = vmul.f32 %v1587, %v410
  %v1610 = vmul.f32 %v1592, %v412
  %v1611 = vmul.f32 %v1597, %v414
  %v1612 = vmul.f32 %v1602, %v416
  %v1613 = vmul.f32 %v1567, %v418
  %v1614 = vmul.f32 %v1572, %v420
  %v1615 = vmul.f32 %v1577, %v422
  %v1616 = vmul.f32 %v1582, %v424
  %v1617 = vmul.f32 %v1587, %v426
  %v1618 = vmul.f32 %v1592, %v428
  %v1619 = vmul.f32 %v1597, %v430
  %v1620 = vmul.f32 %v1602, %v432
  %v1621 = vmul.f32 %v1567, %v434
  %v1622 = vmul.f32 %v1572, %v436
  %v1623 = vmul.f32 %v1577, %v438
  %v1624 = vmul.f32 %v1582, %v440
  %v1625 = vmul.f32 %v1587, %v442
  %v1626 = vmul.f32 %v1592, %v444
  %v1627 = vmul.f32 %v1597, %v446
  %v1628 = vmul.f32 %v1602, %v448
  %v1629 = vmul.f32 %v1567, %v450
  %v1630 = vmul.f32 %v1572, %v452
  %v1631 = vmul.f32 %v1577, %v454
  %v1632 = vmul.f32 %v1582, %v456
  %v1633 = vmul.f32 %v1587, %v458
  %v1634 = vmul.f32 %v1592, %v460
  %v1635 = vmul.f32 %v1597, %v462
  %v1636 = vmul.f32 %v1602, %v464
  %v1637 = vmul.f32 %v1567, %v530
  %v1638 = vmul.f32 %v1572, %v532
  %v1639 = vmul.f32 %v1577, %v534
  %v1640 = vmul.f32 %v1582, %v536
  %v1641 = vmul.f32 %v1587, %v538
  %v1642 = vmul.f32 %v1592, %v540
  %v1643 = vmul.f32 %v1597, %v542
  %v1644 = vmul.f32 %v1602, %v544
  %v1645 = vmul.f32 %v1567, %v546
  %v1646 = vmul.f32 %v1572, %v548
  %v1647 = vmul.f32 %v1577, %v550
  %v1648 = vmul.f32 %v1582, %v552
  %v1649 = vmul.f32 %v1587, %v554
  %v1650 = vmul.f32 %v1592, %v556
  %v1651 = vmul.f32 %v1597, %v558
  %v1652 = vmul.f32 %v1602, %v560
  %v1653 = vmul.f32 %v1567, %v562
  %v1654 = vmul.f32 %v1572, %v564
  %v1655 = vmul.f32 %v1577, %v566
  %v1656 = vmul.f32 %v1582, %v568
  %v1657 = vmul.f32 %v1587, %v570
  %v1658 = vmul.f32 %v1592, %v572
  %v1659 = vmul.f32 %v1597, %v574
  %v1660 = vmul.f32 %v1602, %v576
  %v1661 = vmul.f32 %v1567, %v578
  %v1662 = vmul.f32 %v1572, %v580
  %v1663 = vmul.f32 %v1577, %v582
  %v1664 = vmul.f32 %v1582, %v584
  %v1665 = vmul.f32 %v1587, %v586
  %v1666 = vmul.f32 %v1592, %v588
  %v1667 = vmul.f32 %v1597, %v590
  %v1668 = vmul.f32 %v1602, %v592
  %1701 = vrot.lane.b32.xlu0 %v1637, 64
  %v1702 = vpop.permute.xlu0 %1701
  %1703 = vrot.lane.b32.xlu0 %v1638, 64
  %v1704 = vpop.permute.xlu0 %1703
  %1705 = vrot.lane.b32.xlu0 %v1639, 64
  %v1706 = vpop.permute.xlu0 %1705
  %1707 = vrot.lane.b32.xlu0 %v1640, 64
  %v1708 = vpop.permute.xlu0 %1707
  %1709 = vrot.lane.b32.xlu0 %v1641, 64
  %v1710 = vpop.permute.xlu0 %1709
  %1711 = vrot.lane.b32.xlu0 %v1642, 64
  %v1712 = vpop.permute.xlu0 %1711
  %1713 = vrot.lane.b32.xlu0 %v1643, 64
  %v1714 = vpop.permute.xlu0 %1713
  %1715 = vrot.lane.b32.xlu0 %v1644, 64
  %v1716 = vpop.permute.xlu0 %1715
  %1717 = vrot.lane.b32.xlu0 %v1645, 64
  %v1718 = vpop.permute.xlu0 %1717
  %1719 = vrot.lane.b32.xlu0 %v1646, 64
  %v1720 = vpop.permute.xlu0 %1719
  %1721 = vrot.lane.b32.xlu0 %v1647, 64
  %v1722 = vpop.permute.xlu0 %1721
  %1723 = vrot.lane.b32.xlu0 %v1648, 64
  %v1724 = vpop.permute.xlu0 %1723
  %1725 = vrot.lane.b32.xlu0 %v1649, 64
  %v1726 = vpop.permute.xlu0 %1725
  %1727 = vrot.lane.b32.xlu0 %v1650, 64
  %v1728 = vpop.permute.xlu0 %1727
  %1729 = vrot.lane.b32.xlu0 %v1651, 64
  %v1730 = vpop.permute.xlu0 %1729
  %1731 = vrot.lane.b32.xlu0 %v1652, 64
  %v1732 = vpop.permute.xlu0 %1731
  %1733 = vrot.lane.b32.xlu0 %v1653, 64
  %v1734 = vpop.permute.xlu0 %1733
  %1735 = vrot.lane.b32.xlu0 %v1654, 64
  %v1736 = vpop.permute.xlu0 %1735
  %1737 = vrot.lane.b32.xlu0 %v1655, 64
  %v1738 = vpop.permute.xlu0 %1737
  %1739 = vrot.lane.b32.xlu0 %v1656, 64
  %v1740 = vpop.permute.xlu0 %1739
  %1741 = vrot.lane.b32.xlu0 %v1657, 64
  %v1742 = vpop.permute.xlu0 %1741
  %1743 = vrot.lane.b32.xlu0 %v1658, 64
  %v1744 = vpop.permute.xlu0 %1743
  %1745 = vrot.lane.b32.xlu0 %v1659, 64
  %v1746 = vpop.permute.xlu0 %1745
  %1747 = vrot.lane.b32.xlu0 %v1660, 64
  %v1748 = vpop.permute.xlu0 %1747
  %1749 = vrot.lane.b32.xlu0 %v1661, 64
  %v1750 = vpop.permute.xlu0 %1749
  %1751 = vrot.lane.b32.xlu0 %v1662, 64
  %v1752 = vpop.permute.xlu0 %1751
  %1753 = vrot.lane.b32.xlu0 %v1663, 64
  %v1754 = vpop.permute.xlu0 %1753
  %1755 = vrot.lane.b32.xlu0 %v1664, 64
  %v1756 = vpop.permute.xlu0 %1755
  %1757 = vrot.lane.b32.xlu0 %v1665, 64
  %v1758 = vpop.permute.xlu0 %1757
  %1759 = vrot.lane.b32.xlu0 %v1666, 64
  %v1760 = vpop.permute.xlu0 %1759
  %1761 = vrot.lane.b32.xlu0 %v1667, 64
  %v1762 = vpop.permute.xlu0 %1761
  %1763 = vrot.lane.b32.xlu0 %v1668, 64
  %v1764 = vpop.permute.xlu0 %1763
  %v1797 = vsel %vm239, %v1702, %v402
  %v1798 = vsel %vm239, %v1704, %v404
  %v1799 = vsel %vm239, %v1706, %v406
  %v1800 = vsel %vm239, %v1708, %v408
  %v1801 = vsel %vm239, %v1710, %v410
  %v1802 = vsel %vm239, %v1712, %v412
  %v1803 = vsel %vm239, %v1714, %v414
  %v1804 = vsel %vm239, %v1716, %v416
  %v1805 = vsel %vm239, %v1718, %v418
  %v1806 = vsel %vm239, %v1720, %v420
  %v1807 = vsel %vm239, %v1722, %v422
  %v1808 = vsel %vm239, %v1724, %v424
  %v1809 = vsel %vm239, %v1726, %v426
  %v1810 = vsel %vm239, %v1728, %v428
  %v1811 = vsel %vm239, %v1730, %v430
  %v1812 = vsel %vm239, %v1732, %v432
  %v1813 = vsel %vm239, %v1734, %v434
  %v1814 = vsel %vm239, %v1736, %v436
  %v1815 = vsel %vm239, %v1738, %v438
  %v1816 = vsel %vm239, %v1740, %v440
  %v1817 = vsel %vm239, %v1742, %v442
  %v1818 = vsel %vm239, %v1744, %v444
  %v1819 = vsel %vm239, %v1746, %v446
  %v1820 = vsel %vm239, %v1748, %v448
  %v1821 = vsel %vm239, %v1750, %v450
  %v1822 = vsel %vm239, %v1752, %v452
  %v1823 = vsel %vm239, %v1754, %v454
  %v1824 = vsel %vm239, %v1756, %v456
  %v1825 = vsel %vm239, %v1758, %v458
  %v1826 = vsel %vm239, %v1760, %v460
  %v1827 = vsel %vm239, %v1762, %v462
  %v1828 = vsel %vm239, %v1764, %v464
  %1861 = vrot.lane.b32.xlu0 %v1605, 96
  %v1862 = vpop.permute.xlu0 %1861
  %1863 = vrot.lane.b32.xlu0 %v1606, 96
  %v1864 = vpop.permute.xlu0 %1863
  %1865 = vrot.lane.b32.xlu0 %v1607, 96
  %v1866 = vpop.permute.xlu0 %1865
  %1867 = vrot.lane.b32.xlu0 %v1608, 96
  %v1868 = vpop.permute.xlu0 %1867
  %1869 = vrot.lane.b32.xlu0 %v1609, 96
  %v1870 = vpop.permute.xlu0 %1869
  %1871 = vrot.lane.b32.xlu0 %v1610, 96
  %v1872 = vpop.permute.xlu0 %1871
  %1873 = vrot.lane.b32.xlu0 %v1611, 96
  %v1874 = vpop.permute.xlu0 %1873
  %1875 = vrot.lane.b32.xlu0 %v1612, 96
  %v1876 = vpop.permute.xlu0 %1875
  %1877 = vrot.lane.b32.xlu0 %v1613, 96
  %v1878 = vpop.permute.xlu0 %1877
  %1879 = vrot.lane.b32.xlu0 %v1614, 96
  %v1880 = vpop.permute.xlu0 %1879
  %1881 = vrot.lane.b32.xlu0 %v1615, 96
  %v1882 = vpop.permute.xlu0 %1881
  %1883 = vrot.lane.b32.xlu0 %v1616, 96
  %v1884 = vpop.permute.xlu0 %1883
  %1885 = vrot.lane.b32.xlu0 %v1617, 96
  %v1886 = vpop.permute.xlu0 %1885
  %1887 = vrot.lane.b32.xlu0 %v1618, 96
  %v1888 = vpop.permute.xlu0 %1887
  %1889 = vrot.lane.b32.xlu0 %v1619, 96
  %v1890 = vpop.permute.xlu0 %1889
  %1891 = vrot.lane.b32.xlu0 %v1620, 96
  %v1892 = vpop.permute.xlu0 %1891
  %1893 = vrot.lane.b32.xlu0 %v1621, 96
  %v1894 = vpop.permute.xlu0 %1893
  %1895 = vrot.lane.b32.xlu0 %v1622, 96
  %v1896 = vpop.permute.xlu0 %1895
  %1897 = vrot.lane.b32.xlu0 %v1623, 96
  %v1898 = vpop.permute.xlu0 %1897
  %1899 = vrot.lane.b32.xlu0 %v1624, 96
  %v1900 = vpop.permute.xlu0 %1899
  %1901 = vrot.lane.b32.xlu0 %v1625, 96
  %v1902 = vpop.permute.xlu0 %1901
  %1903 = vrot.lane.b32.xlu0 %v1626, 96
  %v1904 = vpop.permute.xlu0 %1903
  %1905 = vrot.lane.b32.xlu0 %v1627, 96
  %v1906 = vpop.permute.xlu0 %1905
  %1907 = vrot.lane.b32.xlu0 %v1628, 96
  %v1908 = vpop.permute.xlu0 %1907
  %1909 = vrot.lane.b32.xlu0 %v1629, 96
  %v1910 = vpop.permute.xlu0 %1909
  %1911 = vrot.lane.b32.xlu0 %v1630, 96
  %v1912 = vpop.permute.xlu0 %1911
  %1913 = vrot.lane.b32.xlu0 %v1631, 96
  %v1914 = vpop.permute.xlu0 %1913
  %1915 = vrot.lane.b32.xlu0 %v1632, 96
  %v1916 = vpop.permute.xlu0 %1915
  %1917 = vrot.lane.b32.xlu0 %v1633, 96
  %v1918 = vpop.permute.xlu0 %1917
  %1919 = vrot.lane.b32.xlu0 %v1634, 96
  %v1920 = vpop.permute.xlu0 %1919
  %1921 = vrot.lane.b32.xlu0 %v1635, 96
  %v1922 = vpop.permute.xlu0 %1921
  %1923 = vrot.lane.b32.xlu0 %v1636, 96
  %v1924 = vpop.permute.xlu0 %1923
  %v1926 = vsel %vm239, %v1567, 0
  %v1929 = vsel %vm239, %v1572, 0
  %v1932 = vsel %vm239, %v1577, 0
  %v1935 = vsel %vm239, %v1582, 0
  %v1938 = vsel %vm239, %v1587, 0
  %v1941 = vsel %vm239, %v1592, 0
  %v1944 = vsel %vm239, %v1597, 0
  %v1947 = vsel %vm239, %v1602, 0
  %v1949 = vsel %vm239, %v1862, 0
  %v1951 = vsel %vm239, %v1864, 0
  %v1953 = vsel %vm239, %v1866, 0
  %v1955 = vsel %vm239, %v1868, 0
  %v1957 = vsel %vm239, %v1870, 0
  %v1959 = vsel %vm239, %v1872, 0
  %v1961 = vsel %vm239, %v1874, 0
  %v1963 = vsel %vm239, %v1876, 0
  %v1965 = vsel %vm239, %v1878, 0
  %v1967 = vsel %vm239, %v1880, 0
  %v1969 = vsel %vm239, %v1882, 0
  %v1971 = vsel %vm239, %v1884, 0
  %v1973 = vsel %vm239, %v1886, 0
  %v1975 = vsel %vm239, %v1888, 0
  %v1977 = vsel %vm239, %v1890, 0
  %v1979 = vsel %vm239, %v1892, 0
  %v1981 = vsel %vm239, %v1894, 0
  %v1983 = vsel %vm239, %v1896, 0
  %v1985 = vsel %vm239, %v1898, 0
  %v1987 = vsel %vm239, %v1900, 0
  %v1989 = vsel %vm239, %v1902, 0
  %v1991 = vsel %vm239, %v1904, 0
  %v1993 = vsel %vm239, %v1906, 0
  %v1995 = vsel %vm239, %v1908, 0
  %v1997 = vsel %vm239, %v1910, 0
  %v1999 = vsel %vm239, %v1912, 0
  %v2001 = vsel %vm239, %v1914, 0
  %v2003 = vsel %vm239, %v1916, 0
  %v2005 = vsel %vm239, %v1918, 0
  %v2007 = vsel %vm239, %v1920, 0
  %v2009 = vsel %vm239, %v1922, 0
  %v2011 = vsel %vm239, %v1924, 0
  %2013 = vmatprep.subr.mxu0 0.0
  %2014 = vmatpush1.xpose.msra.mxu0 %v1949
  %2015 = vmatprep.subr.mxu0 0.0
  %2016 = vmatpush1.xpose.msra.mxu0 %v1951
  %2017 = vmatprep.subr.mxu0 0.0
  %2018 = vmatpush1.xpose.msra.mxu0 %v1953
  %2019 = vmatprep.subr.mxu0 0.0
  %2020 = vmatpush1.xpose.msra.mxu0 %v1955
  %2021 = vmatprep.subr.mxu0 0.0
  %2022 = vmatpush1.xpose.msra.mxu0 %v1957
  %2023 = vmatprep.subr.mxu0 0.0
  %2024 = vmatpush1.xpose.msra.mxu0 %v1959
  %2025 = vmatprep.subr.mxu0 0.0
  %2026 = vmatpush1.xpose.msra.mxu0 %v1961
  %2027 = vmatprep.subr.mxu0 0.0
  %2028 = vmatpush1.xpose.msra.mxu0 %v1963
  %2029 = vmatprep.subr.mxu0 0.0
  %2030 = vmatpush1.xpose.msra.mxu0 %v1965
  %2031 = vmatprep.subr.mxu0 0.0
  %2032 = vmatpush1.xpose.msra.mxu0 %v1967
  %2033 = vmatprep.subr.mxu0 0.0
  %2034 = vmatpush1.xpose.msra.mxu0 %v1969
  %2035 = vmatprep.subr.mxu0 0.0
  %2036 = vmatpush1.xpose.msra.mxu0 %v1971
  %2037 = vmatprep.subr.mxu0 0.0
  %2038 = vmatpush1.xpose.msra.mxu0 %v1973
  %2039 = vmatprep.subr.mxu0 0.0
  %2040 = vmatpush1.xpose.msra.mxu0 %v1975
  %2041 = vmatprep.subr.mxu0 0.0
  %2042 = vmatpush1.xpose.msra.mxu0 %v1977
  %2043 = vmatprep.subr.mxu0 0.0
  %2044 = vmatpush1.xpose.msra.mxu0 %v1979
  %2045 = vmatprep.subr.mxu0 0.0
  %2046 = vmatpush1.xpose.msra.mxu0 %v1981
  %2047 = vmatprep.subr.mxu0 0.0
  %2048 = vmatpush1.xpose.msra.mxu0 %v1983
  %2049 = vmatprep.subr.mxu0 0.0
  %2050 = vmatpush1.xpose.msra.mxu0 %v1985
  %2051 = vmatprep.subr.mxu0 0.0
  %2052 = vmatpush1.xpose.msra.mxu0 %v1987
  %2053 = vmatprep.subr.mxu0 0.0
  %2054 = vmatpush1.xpose.msra.mxu0 %v1989
  %2055 = vmatprep.subr.mxu0 0.0
  %2056 = vmatpush1.xpose.msra.mxu0 %v1991
  %2057 = vmatprep.subr.mxu0 0.0
  %2058 = vmatpush1.xpose.msra.mxu0 %v1993
  %2059 = vmatprep.subr.mxu0 0.0
  %2060 = vmatpush1.xpose.msra.mxu0 %v1995
  %2061 = vmatprep.subr.mxu0 0.0
  %2062 = vmatpush1.xpose.msra.mxu0 %v1997
  %2063 = vmatprep.subr.mxu0 0.0
  %2064 = vmatpush1.xpose.msra.mxu0 %v1999
  %2065 = vmatprep.subr.mxu0 0.0
  %2066 = vmatpush1.xpose.msra.mxu0 %v2001
  %2067 = vmatprep.subr.mxu0 0.0
  %2068 = vmatpush1.xpose.msra.mxu0 %v2003
  %2069 = vmatprep.subr.mxu0 0.0
  %2070 = vmatpush1.xpose.msra.mxu0 %v2005
  %2071 = vmatprep.subr.mxu0 0.0
  %2072 = vmatpush1.xpose.msra.mxu0 %v2007
  %2073 = vmatprep.subr.mxu0 0.0
  %2074 = vmatpush1.xpose.msra.mxu0 %v2009
  %2075 = vmatprep.subr.mxu0 0.0
  %2076 = vmatpush1.xpose.msra.mxu0 %v2011
  %2077 = vmatprep.mubr.f32.mxu0 0.0
  %2078 = vmatmul.mubr.f32.gmra.mrb[0].mxu0 %v1926
  %v2079 = vpop.f32.mrb[0].mxu0
  %v2080 = vadd.f32 0.0, %v2079
  %v2081 = vpop.f32.mrb[0].mxu0
  %v2082 = vadd.f32 0.0, %v2081
  %2083 = vmatprep.mubr.f32.mxu0 0.0
  %2084 = vmatmul.mubr.f32.gmra.mrb[0].mxu0 %v1929
  %v2085 = vpop.f32.mrb[0].mxu0
  %v2086 = vadd.f32 0.0, %v2085
  %v2087 = vpop.f32.mrb[0].mxu0
  %v2088 = vadd.f32 0.0, %v2087
  %2089 = vmatprep.mubr.f32.mxu0 0.0
  %2090 = vmatmul.mubr.f32.gmra.mrb[0].mxu0 %v1932
  %v2091 = vpop.f32.mrb[0].mxu0
  %v2092 = vadd.f32 0.0, %v2091
  %v2093 = vpop.f32.mrb[0].mxu0
  %v2094 = vadd.f32 0.0, %v2093
  %2095 = vmatprep.mubr.f32.mxu0 0.0
  %2096 = vmatmul.mubr.f32.gmra.mrb[0].mxu0 %v1935
  %v2097 = vpop.f32.mrb[0].mxu0
  %v2098 = vadd.f32 0.0, %v2097
  %v2099 = vpop.f32.mrb[0].mxu0
  %v2100 = vadd.f32 0.0, %v2099
  %2101 = vmatprep.mubr.f32.mxu0 0.0
  %2102 = vmatmul.mubr.f32.gmra.mrb[0].mxu0 %v1938
  %v2103 = vpop.f32.mrb[0].mxu0
  %v2104 = vadd.f32 0.0, %v2103
  %v2105 = vpop.f32.mrb[0].mxu0
  %v2106 = vadd.f32 0.0, %v2105
  %2107 = vmatprep.mubr.f32.mxu0 0.0
  %2108 = vmatmul.mubr.f32.gmra.mrb[0].mxu0 %v1941
  %v2109 = vpop.f32.mrb[0].mxu0
  %v2110 = vadd.f32 0.0, %v2109
  %v2111 = vpop.f32.mrb[0].mxu0
  %v2112 = vadd.f32 0.0, %v2111
  %2113 = vmatprep.mubr.f32.mxu0 0.0
  %2114 = vmatmul.mubr.f32.gmra.mrb[0].mxu0 %v1944
  %v2115 = vpop.f32.mrb[0].mxu0
  %v2116 = vadd.f32 0.0, %v2115
  %v2117 = vpop.f32.mrb[0].mxu0
  %v2118 = vadd.f32 0.0, %v2117
  %2119 = vmatprep.mubr.f32.mxu0 0.0
  %2120 = vmatmul.mubr.f32.gmra.mrb[0].mxu0 %v1947
  %v2121 = vpop.f32.mrb[0].mxu0
  %v2122 = vadd.f32 0.0, %v2121
  %v2123 = vpop.f32.mrb[0].mxu0
  %v2124 = vadd.f32 0.0, %v2123
  %2125 = vdwg.mxu0
  %v2126 = vmax.f32 %v2080, -10.0
  %v2127 = vmax.f32 %v2082, -10.0
  %v2128 = vmax.f32 %v2086, -10.0
  %v2129 = vmax.f32 %v2088, -10.0
  %v2130 = vmax.f32 %v2092, -10.0
  %v2131 = vmax.f32 %v2094, -10.0
  %v2132 = vmax.f32 %v2098, -10.0
  %v2133 = vmax.f32 %v2100, -10.0
  %v2134 = vmax.f32 %v2104, -10.0
  %v2135 = vmax.f32 %v2106, -10.0
  %v2136 = vmax.f32 %v2110, -10.0
  %v2137 = vmax.f32 %v2112, -10.0
  %v2138 = vmax.f32 %v2116, -10.0
  %v2139 = vmax.f32 %v2118, -10.0
  %v2140 = vmax.f32 %v2122, -10.0
  %v2141 = vmax.f32 %v2124, -10.0
  %v2142 = vmin.f32 %v2126, 10.0
  %v2143 = vmin.f32 %v2127, 10.0
  %v2144 = vmin.f32 %v2128, 10.0
  %v2145 = vmin.f32 %v2129, 10.0
  %v2146 = vmin.f32 %v2130, 10.0
  %v2147 = vmin.f32 %v2131, 10.0
  %v2148 = vmin.f32 %v2132, 10.0
  %v2149 = vmin.f32 %v2133, 10.0
  %v2150 = vmin.f32 %v2134, 10.0
  %v2151 = vmin.f32 %v2135, 10.0
  %v2152 = vmin.f32 %v2136, 10.0
  %v2153 = vmin.f32 %v2137, 10.0
  %v2154 = vmin.f32 %v2138, 10.0
  %v2155 = vmin.f32 %v2139, 10.0
  %v2156 = vmin.f32 %v2140, 10.0
  %v2157 = vmin.f32 %v2141, 10.0
  %v2158 = vmul.f32 %v2142, 1.442695
  %v2159 = vpow.pop %v2158
  %v2160 = vmul.f32 %v2143, 1.442695
  %v2161 = vpow.pop %v2160
  %v2162 = vmul.f32 %v2144, 1.442695
  %v2163 = vpow.pop %v2162
  %v2164 = vmul.f32 %v2145, 1.442695
  %v2165 = vpow.pop %v2164
  %v2166 = vmul.f32 %v2146, 1.442695
  %v2167 = vpow.pop %v2166
  %v2168 = vmul.f32 %v2147, 1.442695
  %v2169 = vpow.pop %v2168
  %v2170 = vmul.f32 %v2148, 1.442695
  %v2171 = vpow.pop %v2170
  %v2172 = vmul.f32 %v2149, 1.442695
  %v2173 = vpow.pop %v2172
  %v2174 = vmul.f32 %v2150, 1.442695
  %v2175 = vpow.pop %v2174
  %v2176 = vmul.f32 %v2151, 1.442695
  %v2177 = vpow.pop %v2176
  %v2178 = vmul.f32 %v2152, 1.442695
  %v2179 = vpow.pop %v2178
  %v2180 = vmul.f32 %v2153, 1.442695
  %v2181 = vpow.pop %v2180
  %v2182 = vmul.f32 %v2154, 1.442695
  %v2183 = vpow.pop %v2182
  %v2184 = vmul.f32 %v2155, 1.442695
  %v2185 = vpow.pop %v2184
  %v2186 = vmul.f32 %v2156, 1.442695
  %v2187 = vpow.pop %v2186
  %v2188 = vmul.f32 %v2157, 1.442695
  %v2189 = vpow.pop %v2188
  %v2190 = vsel %vm102, %v2159, 0.0
  %v2191 = vsel %vm102, %v2161, 0.0
  %v2192 = vsel %vm103, %v2163, 0.0
  %v2193 = vsel %vm103, %v2165, 0.0
  %v2194 = vsel %vm104, %v2167, 0.0
  %v2195 = vsel %vm104, %v2169, 0.0
  %v2196 = vsel %vm105, %v2171, 0.0
  %v2197 = vsel %vm105, %v2173, 0.0
  %v2198 = vsel %vm106, %v2175, 0.0
  %v2199 = vsel %vm106, %v2177, 0.0
  %v2200 = vsel %vm107, %v2179, 0.0
  %v2201 = vsel %vm107, %v2181, 0.0
  %v2202 = vsel %vm108, %v2183, 0.0
  %v2203 = vsel %vm108, %v2185, 0.0
  %v2204 = vsel %vm109, %v2187, 0.0
  %v2205 = vsel %vm109, %v2189, 0.0
  %2206 = vmatprep.subr.mxu0 0.0
  %2207 = vmatpush1.msra.mxu0 %v1797
  %2208 = vmatprep.subr.mxu0 0.0
  %2209 = vmatpush1.msra.mxu0 %v1798
  %2210 = vmatprep.subr.mxu0 0.0
  %2211 = vmatpush1.msra.mxu0 %v1799
  %2212 = vmatprep.subr.mxu0 0.0
  %2213 = vmatpush1.msra.mxu0 %v1800
  %2214 = vmatprep.subr.mxu0 0.0
  %2215 = vmatpush1.msra.mxu0 %v1801
  %2216 = vmatprep.subr.mxu0 0.0
  %2217 = vmatpush1.msra.mxu0 %v1802
  %2218 = vmatprep.subr.mxu0 0.0
  %2219 = vmatpush1.msra.mxu0 %v1803
  %2220 = vmatprep.subr.mxu0 0.0
  %2221 = vmatpush1.msra.mxu0 %v1804
  %2222 = vmatprep.subr.mxu0 0.0
  %2223 = vmatpush1.msra.mxu0 %v1805
  %2224 = vmatprep.subr.mxu0 0.0
  %2225 = vmatpush1.msra.mxu0 %v1806
  %2226 = vmatprep.subr.mxu0 0.0
  %2227 = vmatpush1.msra.mxu0 %v1807
  %2228 = vmatprep.subr.mxu0 0.0
  %2229 = vmatpush1.msra.mxu0 %v1808
  %2230 = vmatprep.subr.mxu0 0.0
  %2231 = vmatpush1.msra.mxu0 %v1809
  %2232 = vmatprep.subr.mxu0 0.0
  %2233 = vmatpush1.msra.mxu0 %v1810
  %2234 = vmatprep.subr.mxu0 0.0
  %2235 = vmatpush1.msra.mxu0 %v1811
  %2236 = vmatprep.subr.mxu0 0.0
  %2237 = vmatpush1.msra.mxu0 %v1812
  %2238 = vmatprep.subr.mxu0 0.0
  %2239 = vmatpush1.msra.mxu0 %v1813
  %2240 = vmatprep.subr.mxu0 0.0
  %2241 = vmatpush1.msra.mxu0 %v1814
  %2242 = vmatprep.subr.mxu0 0.0
  %2243 = vmatpush1.msra.mxu0 %v1815
  %2244 = vmatprep.subr.mxu0 0.0
  %2245 = vmatpush1.msra.mxu0 %v1816
  %2246 = vmatprep.subr.mxu0 0.0
  %2247 = vmatpush1.msra.mxu0 %v1817
  %2248 = vmatprep.subr.mxu0 0.0
  %2249 = vmatpush1.msra.mxu0 %v1818
  %2250 = vmatprep.subr.mxu0 0.0
  %2251 = vmatpush1.msra.mxu0 %v1819
  %2252 = vmatprep.subr.mxu0 0.0
  %2253 = vmatpush1.msra.mxu0 %v1820
  %2254 = vmatprep.subr.mxu0 0.0
  %2255 = vmatpush1.msra.mxu0 %v1821
  %2256 = vmatprep.subr.mxu0 0.0
  %2257 = vmatpush1.msra.mxu0 %v1822
  %2258 = vmatprep.subr.mxu0 0.0
  %2259 = vmatpush1.msra.mxu0 %v1823
  %2260 = vmatprep.subr.mxu0 0.0
  %2261 = vmatpush1.msra.mxu0 %v1824
  %2262 = vmatprep.subr.mxu0 0.0
  %2263 = vmatpush1.msra.mxu0 %v1825
  %2264 = vmatprep.subr.mxu0 0.0
  %2265 = vmatpush1.msra.mxu0 %v1826
  %2266 = vmatprep.subr.mxu0 0.0
  %2267 = vmatpush1.msra.mxu0 %v1827
  %2268 = vmatprep.subr.mxu0 0.0
  %2269 = vmatpush1.msra.mxu0 %v1828
  %2270 = vmatprep.mubr.f32.mxu0 %v2191
  %2271 = vmatmul.mubr.f32.gmra.mrb[0].mxu0 %v2190
  %v2272 = vpop.f32.mrb[0].mxu0
  %v2273 = vadd.f32 0.0, %v2272
  %v2274 = vpop.f32.mrb[0].mxu0
  %2275 = vmatprep.mubr.f32.mxu0 %v2193
  %2276 = vmatmul.mubr.f32.gmra.mrb[0].mxu0 %v2192
  %v2277 = vpop.f32.mrb[0].mxu0
  %v2278 = vadd.f32 0.0, %v2277
  %v2279 = vpop.f32.mrb[0].mxu0
  %2280 = vmatprep.mubr.f32.mxu0 %v2195
  %2281 = vmatmul.mubr.f32.gmra.mrb[0].mxu0 %v2194
  %v2282 = vpop.f32.mrb[0].mxu0
  %v2283 = vadd.f32 0.0, %v2282
  %v2284 = vpop.f32.mrb[0].mxu0
  %2285 = vmatprep.mubr.f32.mxu0 %v2197
  %2286 = vmatmul.mubr.f32.gmra.mrb[0].mxu0 %v2196
  %v2287 = vpop.f32.mrb[0].mxu0
  %v2288 = vadd.f32 0.0, %v2287
  %v2289 = vpop.f32.mrb[0].mxu0
  %2290 = vmatprep.mubr.f32.mxu0 %v2199
  %2291 = vmatmul.mubr.f32.gmra.mrb[0].mxu0 %v2198
  %v2292 = vpop.f32.mrb[0].mxu0
  %v2293 = vadd.f32 0.0, %v2292
  %v2294 = vpop.f32.mrb[0].mxu0
  %2295 = vmatprep.mubr.f32.mxu0 %v2201
  %2296 = vmatmul.mubr.f32.gmra.mrb[0].mxu0 %v2200
  %v2297 = vpop.f32.mrb[0].mxu0
  %v2298 = vadd.f32 0.0, %v2297
  %v2299 = vpop.f32.mrb[0].mxu0
  %2300 = vmatprep.mubr.f32.mxu0 %v2203
  %2301 = vmatmul.mubr.f32.gmra.mrb[0].mxu0 %v2202
  %v2302 = vpop.f32.mrb[0].mxu0
  %v2303 = vadd.f32 0.0, %v2302
  %v2304 = vpop.f32.mrb[0].mxu0
  %2305 = vmatprep.mubr.f32.mxu0 %v2205
  %2306 = vmatmul.mubr.f32.gmra.mrb[0].mxu0 %v2204
  %v2307 = vpop.f32.mrb[0].mxu0
  %v2308 = vadd.f32 0.0, %v2307
  %v2309 = vpop.f32.mrb[0].mxu0
  %2310 = vdwg.mxu0
  %v2311 = vadd.f32 %v2273, 1e-08
  %v2312 = vadd.f32 %v2278, 1e-08
  %v2313 = vadd.f32 %v2283, 1e-08
  %v2314 = vadd.f32 %v2288, 1e-08
  %v2315 = vadd.f32 %v2293, 1e-08
  %v2316 = vadd.f32 %v2298, 1e-08
  %v2317 = vadd.f32 %v2303, 1e-08
  %v2318 = vadd.f32 %v2308, 1e-08
  %v2319 = vrcp.pop %v2311
  %v2320 = vrcp.pop %v2312
  %v2321 = vrcp.pop %v2313
  %v2322 = vrcp.pop %v2314
  %v2323 = vrcp.pop %v2315
  %v2324 = vrcp.pop %v2316
  %v2325 = vrcp.pop %v2317
  %v2326 = vrcp.pop %v2318
  %2335 = vrot.lane.b32.xlu0 %v2319, 96
  %v2336 = vpop.permute.xlu0 %2335
  %2337 = vrot.lane.b32.xlu0 %v2320, 96
  %v2338 = vpop.permute.xlu0 %2337
  %2339 = vrot.lane.b32.xlu0 %v2321, 96
  %v2340 = vpop.permute.xlu0 %2339
  %2341 = vrot.lane.b32.xlu0 %v2322, 96
  %v2342 = vpop.permute.xlu0 %2341
  %2343 = vrot.lane.b32.xlu0 %v2323, 96
  %v2344 = vpop.permute.xlu0 %2343
  %2345 = vrot.lane.b32.xlu0 %v2324, 96
  %v2346 = vpop.permute.xlu0 %2345
  %2347 = vrot.lane.b32.xlu0 %v2325, 96
  %v2348 = vpop.permute.xlu0 %2347
  %2349 = vrot.lane.b32.xlu0 %v2326, 96
  %v2350 = vpop.permute.xlu0 %2349
  %v2359 = vmul.f32 %v2273, %v2336
  %v2360 = vmul.f32 %v2278, %v2338
  %v2361 = vmul.f32 %v2283, %v2340
  %v2362 = vmul.f32 %v2288, %v2342
  %v2363 = vmul.f32 %v2293, %v2344
  %v2364 = vmul.f32 %v2298, %v2346
  %v2365 = vmul.f32 %v2303, %v2348
  %v2366 = vmul.f32 %v2308, %v2350
  %v2367 = vadd.f32 %v1363, %v1438
  %v2368 = vadd.f32 %v1364, %v1443
  %v2369 = vadd.f32 %v1365, %v1448
  %v2370 = vadd.f32 %v1366, %v1453
  %v2371 = vadd.f32 %v1367, %v1458
  %v2372 = vadd.f32 %v1368, %v1463
  %v2373 = vadd.f32 %v1369, %v1468
  %v2374 = vadd.f32 %v1370, %v1473
  %v2375 = vadd.f32 %v2367, %v2359
  %v2376 = vadd.f32 %v2368, %v2360
  %v2377 = vadd.f32 %v2369, %v2361
  %v2378 = vadd.f32 %v2370, %v2362
  %v2379 = vadd.f32 %v2371, %v2363
  %v2380 = vadd.f32 %v2372, %v2364
  %v2381 = vadd.f32 %v2373, %v2365
  %v2382 = vadd.f32 %v2374, %v2366
  %2383 = vst.msk [vmem:[%s4] sm:$0xff] %vm239, %v2375
  %2384 = vst.msk [vmem:[%s4 + $0x8] sm:$0xff] %vm239, %v2376
  %2385 = vst.msk [vmem:[%s4 + $0x10] sm:$0xff] %vm239, %v2377
  %2386 = vst.msk [vmem:[%s4 + $0x18] sm:$0xff] %vm239, %v2378
  %2387 = vst.msk [vmem:[%s4 + $0x20] sm:$0xff] %vm239, %v2379
  %2388 = vst.msk [vmem:[%s4 + $0x28] sm:$0xff] %vm239, %v2380
  %2389 = vst.msk [vmem:[%s4 + $0x30] sm:$0xff] %vm239, %v2381
  %2390 = vst.msk [vmem:[%s4 + $0x38] sm:$0xff] %vm239, %v2382
  // Predicated region
  $region18: #{_model_forward.1} parent=0 // pred_check
    _
  $region19: #{_model_forward.1} parent=0 // pred_check_branch
    %2392 = sbr.rel (0) target = $region21
  $region20: #{_model_forward.1} parent=0 // pred_region
    _
  $region21: #{_model_forward.1} parent=0 // pred_fallthru
    _
  // Predicated region
  $region22: #{_model_forward.1} parent=0 // pred_check
    _
  $region23: #{_model_forward.1} parent=0 // pred_check_branch
    %2394 = sbr.rel (0) target = $region25
  $region24: #{_model_forward.1} parent=0 // pred_region
    _
  $region25: #{_model_forward.1} parent=0 // pred_fallthru
    _

</llo_original>
